<compile_context>
chip_gen: v6e
topology: v6e:2x2x1
jax: 0.10.0
libtpu: 0.0.40
codegen_flags: <defaults>
</compile_context>

<pallas_src>
import functools

import numpy as np

import jax
import jax.numpy as jnp
from jax import lax
from jax.experimental import pallas as pl
from jax.experimental.pallas import tpu as pltpu

BN_EPS = 1e-5
LEAKY_SLOPE = 0.01


def _fused_block_kernel(x_ref, w0_ref, g0_ref, be0_ref, w1_ref, g1_ref, be1_ref,
                        m0_ref, m1_ref, pool_ref, o_ref, p0_ref,
                        *, ksize, dilation, padding, width0, width1,
                        cin_pad, c1_pad):
    """Fused conv->BN->lrelu -> avg_pool -> conv->BN->lrelu.

    Layout: activations are (C, N*H*W) with the flat spatial index on lanes.
      x_ref:   (cin_pad, rows0)      input, channel-major flat, channels zero-padded to 8
      w0_ref:  (C1, K*K*cin_pad)     bf16 stage-0 weights, contraction order (kh,kw,ci)
      g0,be0:  (C1, 1) f32           BN scale / shift (stage 0)
      w1_ref:  (C1, K*K*c1_pad)      bf16 stage-1 weights
      g1,be1:  (C1, 1) f32
      m0_ref:  (K*K, rows0) f32      0/1 boundary masks per tap (stage 0)
      m1_ref:  (K*K, rows1) f32      0/1 boundary masks per tap (stage 1)
      pool_ref:(rows0, rows1) bf16   precomputed avg-pool matrix, entries {0, 1/r^2}
      o_ref:   (C1, rows1) f32       lane-dense output
      p0_ref:  (K*K*cin_pad, rows0)  f32 VMEM scratch: stage-0 im2col patches
    """
    rows0 = x_ref.shape[1]
    rows1 = o_ref.shape[1]
    c1 = o_ref.shape[0]

    def tap_offsets(width):
        return [(kh * dilation - padding) * width + (kw * dilation - padding)
                for kh in range(ksize) for kw in range(ksize)]

    def shifted_tap(src, off, nrows, mask_row):
        # A spatial tap (ah, aw) is a constant lane shift of ah*width + aw.
        # pltpu.roll runs on the XLU (free slot vs VALU / vst); the mask zeroes
        # both the zero-padding halo and any lanes that wrapped around the end
        # of the flattened array, so the stores stay full-width and unmasked.
        s = src if off % nrows == 0 else pltpu.roll(src, shift=(-off) % nrows, axis=1)
        return s * mask_row

    def bn_leaky(acc, g_ref, be_ref):
        # Training-mode BatchNorm over all N*H*W positions, folded with the affine
        # params into ONE elementwise pass: y = acc*scale + shift, then leaky_relu.
        # Stats stay f32 (E[x^2]-E[x]^2 form; values are zero-mean-ish here).
        mean = jnp.mean(acc, axis=1, keepdims=True)
        var = jnp.mean(acc * acc, axis=1, keepdims=True) - mean * mean
        scale = g_ref[...] * lax.rsqrt(var + BN_EPS)
        shift = be_ref[...] - mean * scale
        y = acc * scale + shift
        return jnp.where(y > 0, y, LEAKY_SLOPE * y)

    # ---- stage 0: im2col (roll+mask, tile-aligned full-width stores) -> MXU GEMM ----
    x = x_ref[...]
    for t, off in enumerate(tap_offsets(width0)):
        p0_ref[t * cin_pad:(t + 1) * cin_pad, :] = shifted_tap(
            x, off, rows0, m0_ref[t:t + 1, :])
    acc0 = jnp.dot(w0_ref[...], p0_ref[...].astype(jnp.bfloat16),
                   preferred_element_type=jnp.float32)
    y0 = bn_leaky(acc0, g0_ref, be0_ref)                       # (C1, rows0) f32

    # ---- avg_pool2d: one MXU GEMM against the precomputed {0, 1/r^2} matrix ----
    pooled = jnp.dot(y0.astype(jnp.bfloat16), pool_ref[...],
                     preferred_element_type=jnp.float32)       # (C1, rows1) f32

    # ---- stage 1: im2col built in-register (tiny) -> MXU GEMM -> BN -> lrelu ----
    if c1_pad > c1:
        pooled = jnp.concatenate(
            [pooled, jnp.zeros((c1_pad - c1, rows1), pooled.dtype)], axis=0)
    p1 = jnp.concatenate(
        [shifted_tap(pooled, off, rows1, m1_ref[t:t + 1, :])
         for t, off in enumerate(tap_offsets(width1))], axis=0)
    acc1 = jnp.dot(w1_ref[...], p1.astype(jnp.bfloat16),
                   preferred_element_type=jnp.float32)
    o_ref[...] = bn_leaky(acc1, g1_ref, be1_ref).astype(o_ref.dtype)


def conv_dim_reduction_block(x_nchw, params, *, padding, dilation,
                             reduction_factor):
    """Full block. NCHW in, NCHW out. Single fused pallas_call."""
    N, cin, H, W = x_nchw.shape
    w0, w1 = params["w0"], params["w1"]           # OIHW (PyTorch layout)
    C1 = w0.shape[0]
    K = w0.shape[2]
    d, p, r = dilation, padding, reduction_factor

    # The lane-shift im2col assumes "same" convolutions (output spatial == input).
    # TODO(synk): non-"same" padding configs need a padded-scratch im2col path.
    if 2 * p != d * (K - 1):
        raise NotImplementedError("fused kernel requires 2*padding == dilation*(K-1)")

    H1, W1 = H // r, W // r
    rows0, rows1 = N * H * W, N * H1 * W1
    cin_pad = ((cin + 7) // 8) * 8     # sublane-align every im2col tap block
    c1_pad = ((C1 + 7) // 8) * 8

    # ---- trace-time numpy constants: boundary masks & avg-pool matrix ----
    idx0 = np.arange(rows0)
    h0 = (idx0 // W) % H
    wp0 = idx0 % W
    idx1 = np.arange(rows1)
    h1 = (idx1 // W1) % H1
    wp1 = idx1 % W1

    def tap_masks(hpos, wpos, hs, ws):
        m = np.zeros((K * K, hpos.size), np.float32)
        t = 0
        for kh in range(K):
            for kw in range(K):
                ah, aw = kh * d - p, kw * d - p
                m[t] = ((hpos + ah >= 0) & (hpos + ah < hs) &
                        (wpos + aw >= 0) & (wpos + aw < ws))
                t += 1
        return m

    masks0 = tap_masks(h0, wp0, H, W)
    masks1 = tap_masks(h1, wp1, H1, W1)

    # avg_pool2d (floor mode, like F.avg_pool2d default) as a constant one-hot
    # matrix; entries {0, 1/r^2} are exactly representable in bf16.
    in_win = (h0 // r < H1) & (wp0 // r < W1)
    pid = ((idx0 // (H * W)) * H1 + h0 // r) * W1 + wp0 // r
    pool_mat = np.zeros((rows0, rows1), np.float32)
    pool_mat[idx0[in_win], pid[in_win]] = 1.0 / float(r * r)
    # TODO(synk): at production rows, chunk pool_mat and add a flat-spatial grid
    # (row tiles + two-pass BN, dimension_semantics=("parallel",...)) to stay
    # inside v7x's 64 MiB VMEM and use both of its TensorCores.

    # ---- layout plumbing (tiny XLA ops on KB-sized arrays) ----
    x_t = jnp.transpose(x_nchw, (1, 0, 2, 3)).reshape(cin, rows0)
    if cin_pad > cin:
        x_t = jnp.concatenate(
            [x_t, jnp.zeros((cin_pad - cin, rows0), x_t.dtype)], axis=0)

    def pack_weights(w, cpad):
        wk = jnp.transpose(w, (0, 2, 3, 1))             # (Cout, K, K, Cin)
        cin_w = wk.shape[-1]
        if cpad > cin_w:
            wk = jnp.pad(wk, ((0, 0), (0, 0), (0, 0), (0, cpad - cin_w)))
        return wk.reshape(w.shape[0], K * K * cpad).astype(jnp.bfloat16)

    w0m = pack_weights(w0, cin_pad)
    w1m = pack_weights(w1, c1_pad)
    g0 = params["g0"].reshape(C1, 1).astype(jnp.float32)
    be0 = params["be0"].reshape(C1, 1).astype(jnp.float32)
    g1 = params["g1"].reshape(C1, 1).astype(jnp.float32)
    be1 = params["be1"].reshape(C1, 1).astype(jnp.float32)
    # NOTE: conv biases (params["b0"], params["b1"]) are intentionally NOT passed:
    # a per-channel constant before training-mode BN is removed by the mean.

    kernel = functools.partial(
        _fused_block_kernel, ksize=K, dilation=d, padding=p,
        width0=W, width1=W1, cin_pad=cin_pad, c1_pad=c1_pad)

    vmem = pl.BlockSpec(memory_space=pltpu.MemorySpace.VMEM)
    out2d = pl.pallas_call(
        kernel,
        out_shape=jax.ShapeDtypeStruct((C1, rows1), jnp.float32),
        in_specs=[vmem] * 10,
        out_specs=vmem,
        scratch_shapes=[pltpu.VMEM((K * K * cin_pad, rows0), jnp.float32)],
    )(x_t, w0m, g0, be0, w1m, g1, be1,
      jnp.asarray(masks0), jnp.asarray(masks1),
      jnp.asarray(pool_mat, dtype=jnp.bfloat16))

    return jnp.transpose(out2d.reshape(C1, N, H1, W1), (1, 0, 2, 3))


def _reference_block(x_nchw, params, *, padding, dilation, reduction_factor):
    """Pure-JAX f32 reference mirroring the PyTorch module (sanity check only)."""
    hp = lax.Precision.HIGHEST

    def conv_bn_lrelu(x, w, b, g, be):
        y = lax.conv_general_dilated(
            x, w, window_strides=(1, 1),
            padding=[(padding, padding), (padding, padding)],
            rhs_dilation=(dilation, dilation),
            dimension_numbers=("NCHW", "OIHW", "NCHW"),
            precision=hp)
        y = y + b.reshape(1, -1, 1, 1)
        mean = jnp.mean(y, axis=(0, 2, 3), keepdims=True)
        var = jnp.mean((y - mean) ** 2, axis=(0, 2, 3), keepdims=True)
        y = (y - mean) * lax.rsqrt(var + BN_EPS)
        y = y * g.reshape(1, -1, 1, 1) + be.reshape(1, -1, 1, 1)
        return jnp.where(y > 0, y, LEAKY_SLOPE * y)

    r = reduction_factor
    y = conv_bn_lrelu(x_nchw, params["w0"], params["b0"], params["g0"], params["be0"])
    y = lax.reduce_window(y, 0.0, lax.add, (1, 1, r, r), (1, 1, r, r), "VALID")
    y = y / float(r * r)
    y = conv_bn_lrelu(y, params["w1"], params["b1"], params["g1"], params["be1"])
    return y


if __name__ == "__main__":
    # Mirrors ConvolutionalDimensionalityReductionBlock_Batch_Norm config.
    N, C_IN, H, W = 2, 4, 16, 16       # input_shape
    NUM_FILTERS = 8
    KERNEL_SIZE = 3
    PADDING = 1
    DILATION = 1
    REDUCTION_FACTOR = 2
    # bias=True (handled: cancelled exactly by training-mode BN, see kernel comment)

    key = jax.random.PRNGKey(0)
    kx, kw0, kb0, kw1, kb1, kg0, kbe0, kg1, kbe1 = jax.random.split(key, 9)

    x = jax.random.normal(kx, (N, C_IN, H, W), dtype=jnp.float32)

    params = {
        # conv_0 (OIHW, like PyTorch) + bias
        "w0": 0.1 * jax.random.normal(kw0, (NUM_FILTERS, C_IN, KERNEL_SIZE, KERNEL_SIZE),
                                      dtype=jnp.float32),
        "b0": 0.1 * jax.random.normal(kb0, (NUM_FILTERS,), dtype=jnp.float32),
        # batch_norm_0 affine params (perturbed from the 1/0 init to exercise them)
        "g0": 1.0 + 0.1 * jax.random.normal(kg0, (NUM_FILTERS,), dtype=jnp.float32),
        "be0": 0.1 * jax.random.normal(kbe0, (NUM_FILTERS,), dtype=jnp.float32),
        # conv_1 + bias
        "w1": 0.1 * jax.random.normal(kw1, (NUM_FILTERS, NUM_FILTERS, KERNEL_SIZE, KERNEL_SIZE),
                                      dtype=jnp.float32),
        "b1": 0.1 * jax.random.normal(kb1, (NUM_FILTERS,), dtype=jnp.float32),
        # batch_norm_1
        "g1": 1.0 + 0.1 * jax.random.normal(kg1, (NUM_FILTERS,), dtype=jnp.float32),
        "be1": 0.1 * jax.random.normal(kbe1, (NUM_FILTERS,), dtype=jnp.float32),
    }

    out = conv_dim_reduction_block(
        x, params, padding=PADDING, dilation=DILATION,
        reduction_factor=REDUCTION_FACTOR)
    out = jax.block_until_ready(out)

    assert out.shape == (N, NUM_FILTERS, H // REDUCTION_FACTOR, W // REDUCTION_FACTOR), out.shape

    ref = jax.block_until_ready(
        _reference_block(x, params, padding=PADDING, dilation=DILATION,
                         reduction_factor=REDUCTION_FACTOR))
    # Tolerance loosened vs the f32-HIGHEST version: the kernel now uses bf16 GEMM
    # operands (f32 accumulation) per the perf review; operand rounding is ~4e-3
    # relative and compounds through two conv+BN stages.
    assert jnp.allclose(out, ref, rtol=5e-2, atol=5e-2), \
        float(jnp.max(jnp.abs(out - ref)))

    print("KERNEL_OK")
</pallas_src>

<mosaic_0001>
module attributes {stable_mosaic.version = 11 : i64} {
  func.func @_fused_block_kernel(%arg0: memref<8x512xf32, #tpu.memory_space<vmem>>, %arg1: memref<8x72xbf16, #tpu.memory_space<vmem>>, %arg2: memref<8x1xf32, #tpu.memory_space<vmem>>, %arg3: memref<8x1xf32, #tpu.memory_space<vmem>>, %arg4: memref<8x72xbf16, #tpu.memory_space<vmem>>, %arg5: memref<8x1xf32, #tpu.memory_space<vmem>>, %arg6: memref<8x1xf32, #tpu.memory_space<vmem>>, %arg7: memref<9x512xf32, #tpu.memory_space<vmem>>, %arg8: memref<9x128xf32, #tpu.memory_space<vmem>>, %arg9: memref<512x128xbf16, #tpu.memory_space<vmem>>, %arg10: memref<8x128xf32, #tpu.memory_space<vmem>>, %arg11: memref<72x512xf32, #tpu.memory_space<vmem>>) attributes {dimension_semantics = [], scalar_prefetch = 0 : i64, scratch_operands = 1 : i64, tpu.core_type = #tpu.core_type<tc>} {
    %c0 = arith.constant 0 : index
    %c0_0 = arith.constant 0 : index
    %0 = vector.load %arg0[%c0, %c0_0] : memref<8x512xf32, #tpu.memory_space<vmem>>, vector<8x512xf32>
    %c0_1 = arith.constant 0 : index
    %c0_2 = arith.constant 0 : index
    %1 = vector.load %arg7[%c0_1, %c0_2] : memref<9x512xf32, #tpu.memory_space<vmem>>, vector<1x512xf32>
    %c17_i32 = arith.constant 17 : i32
    %2 = tpu.dynamic_rotate %0 by %c17_i32 dim 1 : vector<8x512xf32>, i32 -> vector<8x512xf32>
    %3 = vector.broadcast %1 : vector<1x512xf32> to vector<8x512xf32>
    %4 = arith.mulf %2, %3 : vector<8x512xf32>
    %c0_3 = arith.constant 0 : index
    %c0_4 = arith.constant 0 : index
    %5 = vector.load %arg11[%c0_3, %c0_4] : memref<72x512xf32, #tpu.memory_space<vmem>>, vector<8x512xf32>
    tpu.vector_store %arg11[%c0_3, %c0_4], %4 {strides = array<i32>} : memref<72x512xf32, #tpu.memory_space<vmem>>, vector<8x512xf32>,
    %c1 = arith.constant 1 : index
    %c0_5 = arith.constant 0 : index
    %6 = vector.load %arg7[%c1, %c0_5] : memref<9x512xf32, #tpu.memory_space<vmem>>, vector<1x512xf32>
    %c16_i32 = arith.constant 16 : i32
    %7 = tpu.dynamic_rotate %0 by %c16_i32 dim 1 : vector<8x512xf32>, i32 -> vector<8x512xf32>
    %8 = vector.broadcast %6 : vector<1x512xf32> to vector<8x512xf32>
    %9 = arith.mulf %7, %8 : vector<8x512xf32>
    %c8 = arith.constant 8 : index
    %c0_6 = arith.constant 0 : index
    %10 = vector.load %arg11[%c8, %c0_6] : memref<72x512xf32, #tpu.memory_space<vmem>>, vector<8x512xf32>
    tpu.vector_store %arg11[%c8, %c0_6], %9 {strides = array<i32>} : memref<72x512xf32, #tpu.memory_space<vmem>>, vector<8x512xf32>,
    %c2 = arith.constant 2 : index
    %c0_7 = arith.constant 0 : index
    %11 = vector.load %arg7[%c2, %c0_7] : memref<9x512xf32, #tpu.memory_space<vmem>>, vector<1x512xf32>
    %c15_i32 = arith.constant 15 : i32
    %12 = tpu.dynamic_rotate %0 by %c15_i32 dim 1 : vector<8x512xf32>, i32 -> vector<8x512xf32>
    %13 = vector.broadcast %11 : vector<1x512xf32> to vector<8x512xf32>
    %14 = arith.mulf %12, %13 : vector<8x512xf32>
    %c16 = arith.constant 16 : index
    %c0_8 = arith.constant 0 : index
    %15 = vector.load %arg11[%c16, %c0_8] : memref<72x512xf32, #tpu.memory_space<vmem>>, vector<8x512xf32>
    tpu.vector_store %arg11[%c16, %c0_8], %14 {strides = array<i32>} : memref<72x512xf32, #tpu.memory_space<vmem>>, vector<8x512xf32>,
    %c3 = arith.constant 3 : index
    %c0_9 = arith.constant 0 : index
    %16 = vector.load %arg7[%c3, %c0_9] : memref<9x512xf32, #tpu.memory_space<vmem>>, vector<1x512xf32>
    %c1_i32 = arith.constant 1 : i32
    %17 = tpu.dynamic_rotate %0 by %c1_i32 dim 1 : vector<8x512xf32>, i32 -> vector<8x512xf32>
    %18 = vector.broadcast %16 : vector<1x512xf32> to vector<8x512xf32>
    %19 = arith.mulf %17, %18 : vector<8x512xf32>
    %c24 = arith.constant 24 : index
    %c0_10 = arith.constant 0 : index
    %20 = vector.load %arg11[%c24, %c0_10] : memref<72x512xf32, #tpu.memory_space<vmem>>, vector<8x512xf32>
    tpu.vector_store %arg11[%c24, %c0_10], %19 {strides = array<i32>} : memref<72x512xf32, #tpu.memory_space<vmem>>, vector<8x512xf32>,
    %c4 = arith.constant 4 : index
    %c0_11 = arith.constant 0 : index
    %21 = vector.load %arg7[%c4, %c0_11] : memref<9x512xf32, #tpu.memory_space<vmem>>, vector<1x512xf32>
    %22 = vector.broadcast %21 : vector<1x512xf32> to vector<8x512xf32>
    %23 = arith.mulf %0, %22 : vector<8x512xf32>
    %c32 = arith.constant 32 : index
    %c0_12 = arith.constant 0 : index
    %24 = vector.load %arg11[%c32, %c0_12] : memref<72x512xf32, #tpu.memory_space<vmem>>, vector<8x512xf32>
    tpu.vector_store %arg11[%c32, %c0_12], %23 {strides = array<i32>} : memref<72x512xf32, #tpu.memory_space<vmem>>, vector<8x512xf32>,
    %c5 = arith.constant 5 : index
    %c0_13 = arith.constant 0 : index
    %25 = vector.load %arg7[%c5, %c0_13] : memref<9x512xf32, #tpu.memory_space<vmem>>, vector<1x512xf32>
    %c511_i32 = arith.constant 511 : i32
    %26 = tpu.dynamic_rotate %0 by %c511_i32 dim 1 : vector<8x512xf32>, i32 -> vector<8x512xf32>
    %27 = vector.broadcast %25 : vector<1x512xf32> to vector<8x512xf32>
    %28 = arith.mulf %26, %27 : vector<8x512xf32>
    %c40 = arith.constant 40 : index
    %c0_14 = arith.constant 0 : index
    %29 = vector.load %arg11[%c40, %c0_14] : memref<72x512xf32, #tpu.memory_space<vmem>>, vector<8x512xf32>
    tpu.vector_store %arg11[%c40, %c0_14], %28 {strides = array<i32>} : memref<72x512xf32, #tpu.memory_space<vmem>>, vector<8x512xf32>,
    %c6 = arith.constant 6 : index
    %c0_15 = arith.constant 0 : index
    %30 = vector.load %arg7[%c6, %c0_15] : memref<9x512xf32, #tpu.memory_space<vmem>>, vector<1x512xf32>
    %c497_i32 = arith.constant 497 : i32
    %31 = tpu.dynamic_rotate %0 by %c497_i32 dim 1 : vector<8x512xf32>, i32 -> vector<8x512xf32>
    %32 = vector.broadcast %30 : vector<1x512xf32> to vector<8x512xf32>
    %33 = arith.mulf %31, %32 : vector<8x512xf32>
    %c48 = arith.constant 48 : index
    %c0_16 = arith.constant 0 : index
    %34 = vector.load %arg11[%c48, %c0_16] : memref<72x512xf32, #tpu.memory_space<vmem>>, vector<8x512xf32>
    tpu.vector_store %arg11[%c48, %c0_16], %33 {strides = array<i32>} : memref<72x512xf32, #tpu.memory_space<vmem>>, vector<8x512xf32>,
    %c7 = arith.constant 7 : index
    %c0_17 = arith.constant 0 : index
    %35 = vector.load %arg7[%c7, %c0_17] : memref<9x512xf32, #tpu.memory_space<vmem>>, vector<1x512xf32>
    %c496_i32 = arith.constant 496 : i32
    %36 = tpu.dynamic_rotate %0 by %c496_i32 dim 1 : vector<8x512xf32>, i32 -> vector<8x512xf32>
    %37 = vector.broadcast %35 : vector<1x512xf32> to vector<8x512xf32>
    %38 = arith.mulf %36, %37 : vector<8x512xf32>
    %c56 = arith.constant 56 : index
    %c0_18 = arith.constant 0 : index
    %39 = vector.load %arg11[%c56, %c0_18] : memref<72x512xf32, #tpu.memory_space<vmem>>, vector<8x512xf32>
    tpu.vector_store %arg11[%c56, %c0_18], %38 {strides = array<i32>} : memref<72x512xf32, #tpu.memory_space<vmem>>, vector<8x512xf32>,
    %c8_19 = arith.constant 8 : index
    %c0_20 = arith.constant 0 : index
    %40 = vector.load %arg7[%c8_19, %c0_20] : memref<9x512xf32, #tpu.memory_space<vmem>>, vector<1x512xf32>
    %c495_i32 = arith.constant 495 : i32
    %41 = tpu.dynamic_rotate %0 by %c495_i32 dim 1 : vector<8x512xf32>, i32 -> vector<8x512xf32>
    %42 = vector.broadcast %40 : vector<1x512xf32> to vector<8x512xf32>
    %43 = arith.mulf %41, %42 : vector<8x512xf32>
    %c64 = arith.constant 64 : index
    %c0_21 = arith.constant 0 : index
    %44 = vector.load %arg11[%c64, %c0_21] : memref<72x512xf32, #tpu.memory_space<vmem>>, vector<8x512xf32>
    tpu.vector_store %arg11[%c64, %c0_21], %43 {strides = array<i32>} : memref<72x512xf32, #tpu.memory_space<vmem>>, vector<8x512xf32>,
    %c0_22 = arith.constant 0 : index
    %c0_23 = arith.constant 0 : index
    %45 = vector.load %arg1[%c0_22, %c0_23] : memref<8x72xbf16, #tpu.memory_space<vmem>>, vector<8x72xbf16>
    %c0_24 = arith.constant 0 : index
    %c0_25 = arith.constant 0 : index
    %46 = vector.load %arg11[%c0_24, %c0_25] : memref<72x512xf32, #tpu.memory_space<vmem>>, vector<72x512xf32>
    %47 = arith.truncf %46 : vector<72x512xf32> to vector<72x512xbf16>
    %cst = arith.constant dense<0.000000e+00> : vector<8x512xf32>
    %48 = tpu.matmul %45, %47, %cst {dimension_numbers = #tpu.dot_dimension_numbers<[1], [0], [0], [1], [0, 0, 1, 1], [], []>} : vector<8x72xbf16>, vector<72x512xbf16>, vector<8x512xf32> -> vector<8x512xf32>
    %cst_26 = arith.constant dense<0.000000e+00> : vector<8xf32>
    %49 = vector.multi_reduction <add>, %48, %cst_26 [1] : vector<8x512xf32> to vector<8xf32>
    %50 = vector.shape_cast %49 : vector<8xf32> to vector<8x1xf32>
    %cst_27 = arith.constant 5.120000e+02 : f32
    %51 = vector.broadcast %cst_27 : f32 to vector<8x1xf32>
    %52 = arith.divf %50, %51 : vector<8x1xf32>
    %53 = arith.mulf %48, %48 : vector<8x512xf32>
    %cst_28 = arith.constant dense<0.000000e+00> : vector<8xf32>
    %54 = vector.multi_reduction <add>, %53, %cst_28 [1] : vector<8x512xf32> to vector<8xf32>
    %55 = vector.shape_cast %54 : vector<8xf32> to vector<8x1xf32>
    %cst_29 = arith.constant 5.120000e+02 : f32
    %56 = vector.broadcast %cst_29 : f32 to vector<8x1xf32>
    %57 = arith.divf %55, %56 : vector<8x1xf32>
    %58 = arith.mulf %52, %52 : vector<8x1xf32>
    %59 = arith.subf %57, %58 : vector<8x1xf32>
    %c0_30 = arith.constant 0 : index
    %c0_31 = arith.constant 0 : index
    %60 = vector.load %arg2[%c0_30, %c0_31] : memref<8x1xf32, #tpu.memory_space<vmem>>, vector<8x1xf32>
    %cst_32 = arith.constant 9.99999974E-6 : f32
    %61 = vector.broadcast %cst_32 : f32 to vector<8x1xf32>
    %62 = arith.addf %59, %61 : vector<8x1xf32>
    %63 = math.rsqrt %62 : vector<8x1xf32>
    %64 = arith.mulf %60, %63 : vector<8x1xf32>
    %c0_33 = arith.constant 0 : index
    %c0_34 = arith.constant 0 : index
    %65 = vector.load %arg3[%c0_33, %c0_34] : memref<8x1xf32, #tpu.memory_space<vmem>>, vector<8x1xf32>
    %66 = arith.mulf %52, %64 : vector<8x1xf32>
    %67 = arith.subf %65, %66 : vector<8x1xf32>
    %68 = vector.broadcast %64 : vector<8x1xf32> to vector<8x512xf32>
    %69 = arith.mulf %48, %68 : vector<8x512xf32>
    %70 = vector.broadcast %67 : vector<8x1xf32> to vector<8x512xf32>
    %71 = arith.addf %69, %70 : vector<8x512xf32>
    %cst_35 = arith.constant 0.000000e+00 : f32
    %72 = vector.broadcast %cst_35 : f32 to vector<8x512xf32>
    %73 = arith.cmpf ogt, %71, %72 : vector<8x512xf32>
    %cst_36 = arith.constant 0.00999999977 : f32
    %74 = vector.broadcast %cst_36 : f32 to vector<8x512xf32>
    %75 = arith.mulf %74, %71 : vector<8x512xf32>
    %76 = arith.select %73, %71, %75 : vector<8x512xi1>, vector<8x512xf32>
    %77 = arith.truncf %76 : vector<8x512xf32> to vector<8x512xbf16>
    %c0_37 = arith.constant 0 : index
    %c0_38 = arith.constant 0 : index
    %78 = vector.load %arg9[%c0_37, %c0_38] : memref<512x128xbf16, #tpu.memory_space<vmem>>, vector<512x128xbf16>
    %cst_39 = arith.constant dense<0.000000e+00> : vector<8x128xf32>
    %79 = tpu.matmul %77, %78, %cst_39 {dimension_numbers = #tpu.dot_dimension_numbers<[1], [0], [0], [1], [0, 0, 1, 1], [], []>} : vector<8x512xbf16>, vector<512x128xbf16>, vector<8x128xf32> -> vector<8x128xf32>
    %c0_40 = arith.constant 0 : index
    %c0_41 = arith.constant 0 : index
    %80 = vector.load %arg8[%c0_40, %c0_41] : memref<9x128xf32, #tpu.memory_space<vmem>>, vector<1x128xf32>
    %c9_i32 = arith.constant 9 : i32
    %81 = tpu.dynamic_rotate %79 by %c9_i32 dim 1 : vector<8x128xf32>, i32 -> vector<8x128xf32>
    %82 = vector.broadcast %80 : vector<1x128xf32> to vector<8x128xf32>
    %83 = arith.mulf %81, %82 : vector<8x128xf32>
    %c1_42 = arith.constant 1 : index
    %c0_43 = arith.constant 0 : index
    %84 = vector.load %arg8[%c1_42, %c0_43] : memref<9x128xf32, #tpu.memory_space<vmem>>, vector<1x128xf32>
    %c8_i32 = arith.constant 8 : i32
    %85 = tpu.dynamic_rotate %79 by %c8_i32 dim 1 : vector<8x128xf32>, i32 -> vector<8x128xf32>
    %86 = vector.broadcast %84 : vector<1x128xf32> to vector<8x128xf32>
    %87 = arith.mulf %85, %86 : vector<8x128xf32>
    %c2_44 = arith.constant 2 : index
    %c0_45 = arith.constant 0 : index
    %88 = vector.load %arg8[%c2_44, %c0_45] : memref<9x128xf32, #tpu.memory_space<vmem>>, vector<1x128xf32>
    %c7_i32 = arith.constant 7 : i32
    %89 = tpu.dynamic_rotate %79 by %c7_i32 dim 1 : vector<8x128xf32>, i32 -> vector<8x128xf32>
    %90 = vector.broadcast %88 : vector<1x128xf32> to vector<8x128xf32>
    %91 = arith.mulf %89, %90 : vector<8x128xf32>
    %c3_46 = arith.constant 3 : index
    %c0_47 = arith.constant 0 : index
    %92 = vector.load %arg8[%c3_46, %c0_47] : memref<9x128xf32, #tpu.memory_space<vmem>>, vector<1x128xf32>
    %c1_i32_48 = arith.constant 1 : i32
    %93 = tpu.dynamic_rotate %79 by %c1_i32_48 dim 1 : vector<8x128xf32>, i32 -> vector<8x128xf32>
    %94 = vector.broadcast %92 : vector<1x128xf32> to vector<8x128xf32>
    %95 = arith.mulf %93, %94 : vector<8x128xf32>
    %c4_49 = arith.constant 4 : index
    %c0_50 = arith.constant 0 : index
    %96 = vector.load %arg8[%c4_49, %c0_50] : memref<9x128xf32, #tpu.memory_space<vmem>>, vector<1x128xf32>
    %97 = vector.broadcast %96 : vector<1x128xf32> to vector<8x128xf32>
    %98 = arith.mulf %79, %97 : vector<8x128xf32>
    %c5_51 = arith.constant 5 : index
    %c0_52 = arith.constant 0 : index
    %99 = vector.load %arg8[%c5_51, %c0_52] : memref<9x128xf32, #tpu.memory_space<vmem>>, vector<1x128xf32>
    %c127_i32 = arith.constant 127 : i32
    %100 = tpu.dynamic_rotate %79 by %c127_i32 dim 1 : vector<8x128xf32>, i32 -> vector<8x128xf32>
    %101 = vector.broadcast %99 : vector<1x128xf32> to vector<8x128xf32>
    %102 = arith.mulf %100, %101 : vector<8x128xf32>
    %c6_53 = arith.constant 6 : index
    %c0_54 = arith.constant 0 : index
    %103 = vector.load %arg8[%c6_53, %c0_54] : memref<9x128xf32, #tpu.memory_space<vmem>>, vector<1x128xf32>
    %c121_i32 = arith.constant 121 : i32
    %104 = tpu.dynamic_rotate %79 by %c121_i32 dim 1 : vector<8x128xf32>, i32 -> vector<8x128xf32>
    %105 = vector.broadcast %103 : vector<1x128xf32> to vector<8x128xf32>
    %106 = arith.mulf %104, %105 : vector<8x128xf32>
    %c7_55 = arith.constant 7 : index
    %c0_56 = arith.constant 0 : index
    %107 = vector.load %arg8[%c7_55, %c0_56] : memref<9x128xf32, #tpu.memory_space<vmem>>, vector<1x128xf32>
    %c120_i32 = arith.constant 120 : i32
    %108 = tpu.dynamic_rotate %79 by %c120_i32 dim 1 : vector<8x128xf32>, i32 -> vector<8x128xf32>
    %109 = vector.broadcast %107 : vector<1x128xf32> to vector<8x128xf32>
    %110 = arith.mulf %108, %109 : vector<8x128xf32>
    %c8_57 = arith.constant 8 : index
    %c0_58 = arith.constant 0 : index
    %111 = vector.load %arg8[%c8_57, %c0_58] : memref<9x128xf32, #tpu.memory_space<vmem>>, vector<1x128xf32>
    %c119_i32 = arith.constant 119 : i32
    %112 = tpu.dynamic_rotate %79 by %c119_i32 dim 1 : vector<8x128xf32>, i32 -> vector<8x128xf32>
    %113 = vector.broadcast %111 : vector<1x128xf32> to vector<8x128xf32>
    %114 = arith.mulf %112, %113 : vector<8x128xf32>
    %115 = tpu.concatenate %83, %87, %91, %95, %98, %102, %106, %110, %114 in 0 : vector<8x128xf32>, vector<8x128xf32>, vector<8x128xf32>, vector<8x128xf32>, vector<8x128xf32>, vector<8x128xf32>, vector<8x128xf32>, vector<8x128xf32>, vector<8x128xf32> -> vector<72x128xf32>
    %c0_59 = arith.constant 0 : index
    %c0_60 = arith.constant 0 : index
    %116 = vector.load %arg4[%c0_59, %c0_60] : memref<8x72xbf16, #tpu.memory_space<vmem>>, vector<8x72xbf16>
    %117 = arith.truncf %115 : vector<72x128xf32> to vector<72x128xbf16>
    %cst_61 = arith.constant dense<0.000000e+00> : vector<8x128xf32>
    %118 = tpu.matmul %116, %117, %cst_61 {dimension_numbers = #tpu.dot_dimension_numbers<[1], [0], [0], [1], [0, 0, 1, 1], [], []>} : vector<8x72xbf16>, vector<72x128xbf16>, vector<8x128xf32> -> vector<8x128xf32>
    %cst_62 = arith.constant dense<0.000000e+00> : vector<8xf32>
    %119 = vector.multi_reduction <add>, %118, %cst_62 [1] : vector<8x128xf32> to vector<8xf32>
    %120 = vector.shape_cast %119 : vector<8xf32> to vector<8x1xf32>
    %cst_63 = arith.constant 1.280000e+02 : f32
    %121 = vector.broadcast %cst_63 : f32 to vector<8x1xf32>
    %122 = arith.divf %120, %121 : vector<8x1xf32>
    %123 = arith.mulf %118, %118 : vector<8x128xf32>
    %cst_64 = arith.constant dense<0.000000e+00> : vector<8xf32>
    %124 = vector.multi_reduction <add>, %123, %cst_64 [1] : vector<8x128xf32> to vector<8xf32>
    %125 = vector.shape_cast %124 : vector<8xf32> to vector<8x1xf32>
    %cst_65 = arith.constant 1.280000e+02 : f32
    %126 = vector.broadcast %cst_65 : f32 to vector<8x1xf32>
    %127 = arith.divf %125, %126 : vector<8x1xf32>
    %128 = arith.mulf %122, %122 : vector<8x1xf32>
    %129 = arith.subf %127, %128 : vector<8x1xf32>
    %c0_66 = arith.constant 0 : index
    %c0_67 = arith.constant 0 : index
    %130 = vector.load %arg5[%c0_66, %c0_67] : memref<8x1xf32, #tpu.memory_space<vmem>>, vector<8x1xf32>
    %cst_68 = arith.constant 9.99999974E-6 : f32
    %131 = vector.broadcast %cst_68 : f32 to vector<8x1xf32>
    %132 = arith.addf %129, %131 : vector<8x1xf32>
    %133 = math.rsqrt %132 : vector<8x1xf32>
    %134 = arith.mulf %130, %133 : vector<8x1xf32>
    %c0_69 = arith.constant 0 : index
    %c0_70 = arith.constant 0 : index
    %135 = vector.load %arg6[%c0_69, %c0_70] : memref<8x1xf32, #tpu.memory_space<vmem>>, vector<8x1xf32>
    %136 = arith.mulf %122, %134 : vector<8x1xf32>
    %137 = arith.subf %135, %136 : vector<8x1xf32>
    %138 = vector.broadcast %134 : vector<8x1xf32> to vector<8x128xf32>
    %139 = arith.mulf %118, %138 : vector<8x128xf32>
    %140 = vector.broadcast %137 : vector<8x1xf32> to vector<8x128xf32>
    %141 = arith.addf %139, %140 : vector<8x128xf32>
    %cst_71 = arith.constant 0.000000e+00 : f32
    %142 = vector.broadcast %cst_71 : f32 to vector<8x128xf32>
    %143 = arith.cmpf ogt, %141, %142 : vector<8x128xf32>
    %cst_72 = arith.constant 0.00999999977 : f32
    %144 = vector.broadcast %cst_72 : f32 to vector<8x128xf32>
    %145 = arith.mulf %144, %141 : vector<8x128xf32>
    %146 = arith.select %143, %141, %145 : vector<8x128xi1>, vector<8x128xf32>
    %c0_73 = arith.constant 0 : index
    %c0_74 = arith.constant 0 : index
    %147 = vector.load %arg10[%c0_73, %c0_74] : memref<8x128xf32, #tpu.memory_space<vmem>>, vector<8x128xf32>
    tpu.vector_store %arg10[%c0_73, %c0_74], %146 {strides = array<i32>} : memref<8x128xf32, #tpu.memory_space<vmem>>, vector<8x128xf32>,
    return
  }
}

</mosaic_0001>

<llo_original>
// kernel: tpu_custom_call.1
$region0: #{tpu_custom_call.1}
  #allocation0 [shape = 'u32[]', space=smem, size = 0x4, offset = 0x4, fixed_abs, tag = 'smem constant byte address 0x4 - core index']
  #allocation1 [shape = 'u32[144,128]{1,0:T(1,128)}', space=vmem, size = 0x12000, scoped, tag = 'internal scratch']
  #allocation2 [shape = 'f32[72,512]{1,0:T(8,128)}', space=vmem, size = 0x24000, scoped, tag = 'scratch operand']
  %s0 = inlined_call_operand.vmem [shape: f32[8,512], index: 0, kind: input, shape index: {}]
  %s1 = inlined_call_operand.hbm [shape: bf16[8,72], index: 1, kind: input, shape index: {}]
  %s2 = inlined_call_operand.vmem [shape: f32[8,1], index: 2, kind: input, shape index: {}]
  %s3 = inlined_call_operand.vmem [shape: f32[8,1], index: 3, kind: input, shape index: {}]
  %s4 = inlined_call_operand.hbm [shape: bf16[8,72], index: 4, kind: input, shape index: {}]
  %s5 = inlined_call_operand.vmem [shape: f32[8,1], index: 5, kind: input, shape index: {}]
  %s6 = inlined_call_operand.vmem [shape: f32[8,1], index: 6, kind: input, shape index: {}]
  %s7 = inlined_call_operand.hbm [shape: f32[9,512], index: 7, kind: input, shape index: {}]
  %s8 = inlined_call_operand.vmem [shape: f32[9,128], index: 8, kind: input, shape index: {}]
  %s9 = inlined_call_operand.hbm [shape: bf16[512,128], index: 9, kind: input, shape index: {}]
  %s10 = inlined_call_operand.hbm [shape: f32[8,128], index: 10, kind: output, shape index: {}]
  %s11 = sld [smem:[#allocation0]]
  $region66: #{tpu_custom_call.1} parent=0
    _
  %s13 = ssub.s32 1, %s11
  %s14 = scalar_select 0, %s13, %s11
  $region1: #{tpu_custom_call.1} parent=0
    #allocation3 [shape = 'u8[2048]{0}', space=vmem, size = 0x800, scoped, tag = 'input window, operand 1, single buffered']
    #allocation4 [shape = 's32[1]{0}', space=sflag, size = 0x4, scoped, tag = 'scoped memory for tpu_custom_call.1']
    #allocation5 [shape = 's32[1]{0}', space=sflag, size = 0x4, scoped, tag = 'scoped memory for tpu_custom_call.1']
    #allocation6 [shape = 'u8[2048]{0}', space=vmem, size = 0x800, scoped, tag = 'input window, operand 4, single buffered']
    #allocation7 [shape = 's32[1]{0}', space=sflag, size = 0x4, scoped, tag = 'scoped memory for tpu_custom_call.1']
    #allocation8 [shape = 'u8[32768]{0}', space=vmem, size = 0x8000, scoped, tag = 'input window, operand 7, single buffered']
    #allocation9 [shape = 'u8[131072]{0}', space=vmem, size = 0x20000, scoped, tag = 'input window, operand 9, single buffered']
    #allocation10 [shape = 's32[1]{0}', space=sflag, size = 0x4, scoped, tag = 'scoped memory for tpu_custom_call.1']
    #allocation11 [shape = 'u8[4096]{0}', space=vmem, size = 0x1000, scoped, tag = 'output window, operand 0, single buffered']
    %15 = vsyncpa [#allocation4], 0
    %16 = vsyncpa [#allocation7], 0
    %17 = vsyncpa [#allocation10], 0
    %18 = vsyncpa [#allocation5], 0
    // Predicated region
    $region2: #{tpu_custom_call.1} parent=1 // pred_check
      _
    $region3: #{tpu_custom_call.1} parent=1 // pred_check_branch
      %20 = sbr.rel (0) target = $region5
    $region4: #{tpu_custom_call.1} parent=1 // pred_region
      _
    $region5: #{tpu_custom_call.1} parent=1 // pred_fallthru
      _
    // Predicated region
    $region6: #{tpu_custom_call.1} parent=1 // pred_check
      _
    $region7: #{tpu_custom_call.1} parent=1 // pred_check_branch
      %22 = sbr.rel (0) target = $region9
    $region8: #{tpu_custom_call.1} parent=1 // pred_region
      %s24 = ssub.s32 64, 64
      %25 = vsyncadd [#allocation4], %s24
      %s27 = sshll.u32 [#allocation3], 4
      %s28 = int_to_ptr.vmem [resolvable:$true] %s27
      %30 = dma.hbm_to_vmem [thread:$0]  %s1, 64, %s28, [#allocation4]
    $region9: #{tpu_custom_call.1} parent=1 // pred_fallthru
      _
    // Predicated region
    $region10: #{tpu_custom_call.1} parent=1 // pred_check
      _
    $region11: #{tpu_custom_call.1} parent=1 // pred_check_branch
      %32 = sbr.rel (0) target = $region13
    $region12: #{tpu_custom_call.1} parent=1 // pred_region
      _
    $region13: #{tpu_custom_call.1} parent=1 // pred_fallthru
      _
    // Predicated region
    $region14: #{tpu_custom_call.1} parent=1 // pred_check
      _
    $region15: #{tpu_custom_call.1} parent=1 // pred_check_branch
      %34 = sbr.rel (0) target = $region17
    $region16: #{tpu_custom_call.1} parent=1 // pred_region
      _
    $region17: #{tpu_custom_call.1} parent=1 // pred_fallthru
      _
    // Predicated region
    $region18: #{tpu_custom_call.1} parent=1 // pred_check
      _
    $region19: #{tpu_custom_call.1} parent=1 // pred_check_branch
      %36 = sbr.rel (0) target = $region21
    $region20: #{tpu_custom_call.1} parent=1 // pred_region
      %s38 = ssub.s32 64, 64
      %39 = vsyncadd [#allocation7], %s38
      %s41 = sshll.u32 [#allocation6], 4
      %s42 = int_to_ptr.vmem [resolvable:$true] %s41
      %44 = dma.hbm_to_vmem [thread:$0]  %s4, 64, %s42, [#allocation7]
    $region21: #{tpu_custom_call.1} parent=1 // pred_fallthru
      _
    // Predicated region
    $region22: #{tpu_custom_call.1} parent=1 // pred_check
      _
    $region23: #{tpu_custom_call.1} parent=1 // pred_check_branch
      %46 = sbr.rel (0) target = $region25
    $region24: #{tpu_custom_call.1} parent=1 // pred_region
      _
    $region25: #{tpu_custom_call.1} parent=1 // pred_fallthru
      _
    // Predicated region
    $region26: #{tpu_custom_call.1} parent=1 // pred_check
      _
    $region27: #{tpu_custom_call.1} parent=1 // pred_check_branch
      %48 = sbr.rel (0) target = $region29
    $region28: #{tpu_custom_call.1} parent=1 // pred_region
      _
    $region29: #{tpu_custom_call.1} parent=1 // pred_fallthru
      _
    // Predicated region
    $region30: #{tpu_custom_call.1} parent=1 // pred_check
      _
    $region31: #{tpu_custom_call.1} parent=1 // pred_check_branch
      %50 = sbr.rel (0) target = $region33
    $region32: #{tpu_custom_call.1} parent=1 // pred_region
      %s52 = ssub.s32 1024, 1024
      %53 = vsyncadd [#allocation7], %s52
      %s54 = sshll.u32 [#allocation8], 4
      %s55 = int_to_ptr.vmem [resolvable:$true] %s54
      %60 = dma.hbm_to_vmem [thread:$0]  %s7, 1024, %s55, [#allocation7], 512, 512, 32
    $region33: #{tpu_custom_call.1} parent=1 // pred_fallthru
      _
    // Predicated region
    $region34: #{tpu_custom_call.1} parent=1 // pred_check
      _
    $region35: #{tpu_custom_call.1} parent=1 // pred_check_branch
      %62 = sbr.rel (0) target = $region37
    $region36: #{tpu_custom_call.1} parent=1 // pred_region
      _
    $region37: #{tpu_custom_call.1} parent=1 // pred_fallthru
      _
    // Predicated region
    $region38: #{tpu_custom_call.1} parent=1 // pred_check
      _
    $region39: #{tpu_custom_call.1} parent=1 // pred_check_branch
      %64 = sbr.rel (0) target = $region41
    $region40: #{tpu_custom_call.1} parent=1 // pred_region
      %s66 = ssub.s32 4096, 4096
      %67 = vsyncadd [#allocation10], %s66
      %s68 = sshll.u32 [#allocation9], 4
      %s69 = int_to_ptr.vmem [resolvable:$true] %s68
      %74 = dma.hbm_to_vmem [thread:$0]  %s9, 4096, %s69, [#allocation10], 64, 64, 4
    $region41: #{tpu_custom_call.1} parent=1 // pred_fallthru
      _
    // Predicated region
    $region42: #{tpu_custom_call.1} parent=1 // pred_check
      _
    $region43: #{tpu_custom_call.1} parent=1 // pred_check_branch
      %76 = sbr.rel (0) target = $region45
    $region44: #{tpu_custom_call.1} parent=1 // pred_region
      %77 = dma.done [#allocation4], 64
    $region45: #{tpu_custom_call.1} parent=1 // pred_fallthru
      _
    // Predicated region
    $region46: #{tpu_custom_call.1} parent=1 // pred_check
      _
    $region47: #{tpu_custom_call.1} parent=1 // pred_check_branch
      %79 = sbr.rel (0) target = $region49
    $region48: #{tpu_custom_call.1} parent=1 // pred_region
      %80 = dma.done [#allocation7], 64
    $region49: #{tpu_custom_call.1} parent=1 // pred_fallthru
      _
    // Predicated region
    $region50: #{tpu_custom_call.1} parent=1 // pred_check
      _
    $region51: #{tpu_custom_call.1} parent=1 // pred_check_branch
      %82 = sbr.rel (0) target = $region53
    $region52: #{tpu_custom_call.1} parent=1 // pred_region
      %83 = dma.done [#allocation7], 1024
    $region53: #{tpu_custom_call.1} parent=1 // pred_fallthru
      _
    // Predicated region
    $region54: #{tpu_custom_call.1} parent=1 // pred_check
      _
    $region55: #{tpu_custom_call.1} parent=1 // pred_check_branch
      %85 = sbr.rel (0) target = $region57
    $region56: #{tpu_custom_call.1} parent=1 // pred_region
      %86 = dma.done [#allocation10], 4096
    $region57: #{tpu_custom_call.1} parent=1 // pred_fallthru
      _
    %v88 = vld [vmem:[%s0] sm:$0xff]
    %v89 = vld [vmem:[%s0 + $0x8] sm:$0xff]
    %v90 = vld [vmem:[%s0 + $0x10] sm:$0xff]
    %v91 = vld [vmem:[%s0 + $0x18] sm:$0xff]
    %v92 = vld [vmem:[#allocation8] ss:$8 sm:$0xf]
    %93 = vrot.lane.b32.xlu0 %v88, 17
    %v94 = vpop.permute.xlu0 %93
    %95 = vrot.lane.b32.xlu0 %v89, 17
    %v96 = vpop.permute.xlu0 %95
    %97 = vrot.lane.b32.xlu0 %v90, 17
    %v98 = vpop.permute.xlu0 %97
    %99 = vrot.lane.b32.xlu0 %v91, 17
    %v100 = vpop.permute.xlu0 %99
    %v101 = vlaneseq
    %v102 = vand.u32 %v101, 127
    %vm103 = vcmp.lt.s32.totalorder %v102, 17
    %v104 = vsel %vm103, %v98, %v100
    %v105 = vsel %vm103, %v96, %v98
    %v106 = vsel %vm103, %v94, %v96
    %v107 = vsel %vm103, %v100, %v94
    %v109 = vlaneseq
    %v110 = vshrl.u32 %v109, 7
    %v111 = vsub.s32 0, %v110
    %v112 = vrot.slane %v92, %v111
    %v113 = vlaneseq
    %v114 = vshrl.u32 %v113, 7
    %v115 = vsub.s32 1, %v114
    %v116 = vrot.slane %v92, %v115
    %v117 = vlaneseq
    %v118 = vshrl.u32 %v117, 7
    %v119 = vsub.s32 2, %v118
    %v120 = vrot.slane %v92, %v119
    %v121 = vlaneseq
    %v122 = vshrl.u32 %v121, 7
    %v123 = vsub.s32 3, %v122
    %v124 = vrot.slane %v92, %v123
    %v129 = vmul.f32 %v107, %v112
    %v130 = vmul.f32 %v106, %v116
    %v131 = vmul.f32 %v105, %v120
    %v132 = vmul.f32 %v104, %v124
    %133 = vst [vmem:[#allocation2] sm:$0xff] %v129
    %134 = vst [vmem:[#allocation2 + $0x8] sm:$0xff] %v130
    %135 = vst [vmem:[#allocation2 + $0x10] sm:$0xff] %v131
    %136 = vst [vmem:[#allocation2 + $0x18] sm:$0xff] %v132
    %s137 = scalar_lea.vmem [#allocation8], 1
    %v138 = vld [vmem:[%s137] ss:$8 sm:$0xf]
    %139 = vrot.lane.b32.xlu0 %v88, 16
    %v140 = vpop.permute.xlu0 %139
    %141 = vrot.lane.b32.xlu0 %v89, 16
    %v142 = vpop.permute.xlu0 %141
    %143 = vrot.lane.b32.xlu0 %v90, 16
    %v144 = vpop.permute.xlu0 %143
    %145 = vrot.lane.b32.xlu0 %v91, 16
    %v146 = vpop.permute.xlu0 %145
    %vm147 = vcmp.lt.s32.totalorder %v102, 16
    %v148 = vsel %vm147, %v144, %v146
    %v149 = vsel %vm147, %v142, %v144
    %v150 = vsel %vm147, %v140, %v142
    %v151 = vsel %vm147, %v146, %v140
    %v153 = vlaneseq
    %v154 = vshrl.u32 %v153, 7
    %v155 = vsub.s32 0, %v154
    %v156 = vrot.slane %v138, %v155
    %v157 = vlaneseq
    %v158 = vshrl.u32 %v157, 7
    %v159 = vsub.s32 1, %v158
    %v160 = vrot.slane %v138, %v159
    %v161 = vlaneseq
    %v162 = vshrl.u32 %v161, 7
    %v163 = vsub.s32 2, %v162
    %v164 = vrot.slane %v138, %v163
    %v165 = vlaneseq
    %v166 = vshrl.u32 %v165, 7
    %v167 = vsub.s32 3, %v166
    %v168 = vrot.slane %v138, %v167
    %v173 = vmul.f32 %v151, %v156
    %v174 = vmul.f32 %v150, %v160
    %v175 = vmul.f32 %v149, %v164
    %v176 = vmul.f32 %v148, %v168
    %177 = vst [vmem:[#allocation2 + $0x20] sm:$0xff] %v173
    %178 = vst [vmem:[#allocation2 + $0x28] sm:$0xff] %v174
    %179 = vst [vmem:[#allocation2 + $0x30] sm:$0xff] %v175
    %180 = vst [vmem:[#allocation2 + $0x38] sm:$0xff] %v176
    %s181 = scalar_lea.vmem [#allocation8], 2
    %v182 = vld [vmem:[%s181] ss:$8 sm:$0xf]
    %183 = vrot.lane.b32.xlu0 %v88, 15
    %v184 = vpop.permute.xlu0 %183
    %185 = vrot.lane.b32.xlu0 %v89, 15
    %v186 = vpop.permute.xlu0 %185
    %187 = vrot.lane.b32.xlu0 %v90, 15
    %v188 = vpop.permute.xlu0 %187
    %189 = vrot.lane.b32.xlu0 %v91, 15
    %v190 = vpop.permute.xlu0 %189
    %vm191 = vcmp.lt.s32.totalorder %v102, 15
    %v192 = vsel %vm191, %v188, %v190
    %v193 = vsel %vm191, %v186, %v188
    %v194 = vsel %vm191, %v184, %v186
    %v195 = vsel %vm191, %v190, %v184
    %v197 = vlaneseq
    %v198 = vshrl.u32 %v197, 7
    %v199 = vsub.s32 0, %v198
    %v200 = vrot.slane %v182, %v199
    %v201 = vlaneseq
    %v202 = vshrl.u32 %v201, 7
    %v203 = vsub.s32 1, %v202
    %v204 = vrot.slane %v182, %v203
    %v205 = vlaneseq
    %v206 = vshrl.u32 %v205, 7
    %v207 = vsub.s32 2, %v206
    %v208 = vrot.slane %v182, %v207
    %v209 = vlaneseq
    %v210 = vshrl.u32 %v209, 7
    %v211 = vsub.s32 3, %v210
    %v212 = vrot.slane %v182, %v211
    %v217 = vmul.f32 %v195, %v200
    %v218 = vmul.f32 %v194, %v204
    %v219 = vmul.f32 %v193, %v208
    %v220 = vmul.f32 %v192, %v212
    %221 = vst [vmem:[#allocation2 + $0x40] sm:$0xff] %v217
    %222 = vst [vmem:[#allocation2 + $0x48] sm:$0xff] %v218
    %223 = vst [vmem:[#allocation2 + $0x50] sm:$0xff] %v219
    %224 = vst [vmem:[#allocation2 + $0x58] sm:$0xff] %v220
    %s225 = scalar_lea.vmem [#allocation8], 3
    %v226 = vld [vmem:[%s225] ss:$8 sm:$0xf]
    %227 = vrot.lane.b32.xlu0 %v88, 1
    %v228 = vpop.permute.xlu0 %227
    %229 = vrot.lane.b32.xlu0 %v89, 1
    %v230 = vpop.permute.xlu0 %229
    %231 = vrot.lane.b32.xlu0 %v90, 1
    %v232 = vpop.permute.xlu0 %231
    %233 = vrot.lane.b32.xlu0 %v91, 1
    %v234 = vpop.permute.xlu0 %233
    %vm235 = vcmp.lt.s32.totalorder %v102, 1
    %v236 = vsel %vm235, %v232, %v234
    %v237 = vsel %vm235, %v230, %v232
    %v238 = vsel %vm235, %v228, %v230
    %v239 = vsel %vm235, %v234, %v228
    %v241 = vlaneseq
    %v242 = vshrl.u32 %v241, 7
    %v243 = vsub.s32 0, %v242
    %v244 = vrot.slane %v226, %v243
    %v245 = vlaneseq
    %v246 = vshrl.u32 %v245, 7
    %v247 = vsub.s32 1, %v246
    %v248 = vrot.slane %v226, %v247
    %v249 = vlaneseq
    %v250 = vshrl.u32 %v249, 7
    %v251 = vsub.s32 2, %v250
    %v252 = vrot.slane %v226, %v251
    %v253 = vlaneseq
    %v254 = vshrl.u32 %v253, 7
    %v255 = vsub.s32 3, %v254
    %v256 = vrot.slane %v226, %v255
    %v261 = vmul.f32 %v239, %v244
    %v262 = vmul.f32 %v238, %v248
    %v263 = vmul.f32 %v237, %v252
    %v264 = vmul.f32 %v236, %v256
    %265 = vst [vmem:[#allocation2 + $0x60] sm:$0xff] %v261
    %266 = vst [vmem:[#allocation2 + $0x68] sm:$0xff] %v262
    %267 = vst [vmem:[#allocation2 + $0x70] sm:$0xff] %v263
    %268 = vst [vmem:[#allocation2 + $0x78] sm:$0xff] %v264
    %s269 = scalar_lea.vmem [#allocation8], 4
    %v270 = vld [vmem:[%s269] ss:$8 sm:$0xf]
    %v272 = vlaneseq
    %v273 = vshrl.u32 %v272, 7
    %v274 = vsub.s32 0, %v273
    %v275 = vrot.slane %v270, %v274
    %v276 = vlaneseq
    %v277 = vshrl.u32 %v276, 7
    %v278 = vsub.s32 1, %v277
    %v279 = vrot.slane %v270, %v278
    %v280 = vlaneseq
    %v281 = vshrl.u32 %v280, 7
    %v282 = vsub.s32 2, %v281
    %v283 = vrot.slane %v270, %v282
    %v284 = vlaneseq
    %v285 = vshrl.u32 %v284, 7
    %v286 = vsub.s32 3, %v285
    %v287 = vrot.slane %v270, %v286
    %v292 = vmul.f32 %v88, %v275
    %v293 = vmul.f32 %v89, %v279
    %v294 = vmul.f32 %v90, %v283
    %v295 = vmul.f32 %v91, %v287
    %296 = vst [vmem:[#allocation2 + $0x80] sm:$0xff] %v292
    %297 = vst [vmem:[#allocation2 + $0x88] sm:$0xff] %v293
    %298 = vst [vmem:[#allocation2 + $0x90] sm:$0xff] %v294
    %299 = vst [vmem:[#allocation2 + $0x98] sm:$0xff] %v295
    %s300 = scalar_lea.vmem [#allocation8], 5
    %v301 = vld [vmem:[%s300] ss:$8 sm:$0xf]
    %302 = vrot.lane.b32.xlu0 %v88, 127
    %v303 = vpop.permute.xlu0 %302
    %304 = vrot.lane.b32.xlu0 %v89, 127
    %v305 = vpop.permute.xlu0 %304
    %306 = vrot.lane.b32.xlu0 %v90, 127
    %v307 = vpop.permute.xlu0 %306
    %308 = vrot.lane.b32.xlu0 %v91, 127
    %v309 = vpop.permute.xlu0 %308
    %vm310 = vcmp.lt.s32.totalorder %v102, 127
    %v311 = vsel %vm310, %v307, %v309
    %v312 = vsel %vm310, %v305, %v307
    %v313 = vsel %vm310, %v303, %v305
    %v314 = vsel %vm310, %v309, %v303
    %v316 = vlaneseq
    %v317 = vshrl.u32 %v316, 7
    %v318 = vsub.s32 0, %v317
    %v319 = vrot.slane %v301, %v318
    %v320 = vlaneseq
    %v321 = vshrl.u32 %v320, 7
    %v322 = vsub.s32 1, %v321
    %v323 = vrot.slane %v301, %v322
    %v324 = vlaneseq
    %v325 = vshrl.u32 %v324, 7
    %v326 = vsub.s32 2, %v325
    %v327 = vrot.slane %v301, %v326
    %v328 = vlaneseq
    %v329 = vshrl.u32 %v328, 7
    %v330 = vsub.s32 3, %v329
    %v331 = vrot.slane %v301, %v330
    %v336 = vmul.f32 %v313, %v319
    %v337 = vmul.f32 %v312, %v323
    %v338 = vmul.f32 %v311, %v327
    %v339 = vmul.f32 %v314, %v331
    %340 = vst [vmem:[#allocation2 + $0xa0] sm:$0xff] %v336
    %341 = vst [vmem:[#allocation2 + $0xa8] sm:$0xff] %v337
    %342 = vst [vmem:[#allocation2 + $0xb0] sm:$0xff] %v338
    %343 = vst [vmem:[#allocation2 + $0xb8] sm:$0xff] %v339
    %s344 = scalar_lea.vmem [#allocation8], 6
    %v345 = vld [vmem:[%s344] ss:$8 sm:$0xf]
    %346 = vrot.lane.b32.xlu0 %v88, 113
    %v347 = vpop.permute.xlu0 %346
    %348 = vrot.lane.b32.xlu0 %v89, 113
    %v349 = vpop.permute.xlu0 %348
    %350 = vrot.lane.b32.xlu0 %v90, 113
    %v351 = vpop.permute.xlu0 %350
    %352 = vrot.lane.b32.xlu0 %v91, 113
    %v353 = vpop.permute.xlu0 %352
    %vm354 = vcmp.lt.s32.totalorder %v102, 113
    %v355 = vsel %vm354, %v351, %v353
    %v356 = vsel %vm354, %v349, %v351
    %v357 = vsel %vm354, %v347, %v349
    %v358 = vsel %vm354, %v353, %v347
    %v360 = vlaneseq
    %v361 = vshrl.u32 %v360, 7
    %v362 = vsub.s32 0, %v361
    %v363 = vrot.slane %v345, %v362
    %v364 = vlaneseq
    %v365 = vshrl.u32 %v364, 7
    %v366 = vsub.s32 1, %v365
    %v367 = vrot.slane %v345, %v366
    %v368 = vlaneseq
    %v369 = vshrl.u32 %v368, 7
    %v370 = vsub.s32 2, %v369
    %v371 = vrot.slane %v345, %v370
    %v372 = vlaneseq
    %v373 = vshrl.u32 %v372, 7
    %v374 = vsub.s32 3, %v373
    %v375 = vrot.slane %v345, %v374
    %v380 = vmul.f32 %v357, %v363
    %v381 = vmul.f32 %v356, %v367
    %v382 = vmul.f32 %v355, %v371
    %v383 = vmul.f32 %v358, %v375
    %384 = vst [vmem:[#allocation2 + $0xc0] sm:$0xff] %v380
    %385 = vst [vmem:[#allocation2 + $0xc8] sm:$0xff] %v381
    %386 = vst [vmem:[#allocation2 + $0xd0] sm:$0xff] %v382
    %387 = vst [vmem:[#allocation2 + $0xd8] sm:$0xff] %v383
    %s388 = scalar_lea.vmem [#allocation8], 7
    %v389 = vld [vmem:[%s388] ss:$8 sm:$0xf]
    %390 = vrot.lane.b32.xlu0 %v88, 112
    %v391 = vpop.permute.xlu0 %390
    %392 = vrot.lane.b32.xlu0 %v89, 112
    %v393 = vpop.permute.xlu0 %392
    %394 = vrot.lane.b32.xlu0 %v90, 112
    %v395 = vpop.permute.xlu0 %394
    %396 = vrot.lane.b32.xlu0 %v91, 112
    %v397 = vpop.permute.xlu0 %396
    %vm398 = vcmp.lt.s32.totalorder %v102, 112
    %v399 = vsel %vm398, %v395, %v397
    %v400 = vsel %vm398, %v393, %v395
    %v401 = vsel %vm398, %v391, %v393
    %v402 = vsel %vm398, %v397, %v391
    %v404 = vlaneseq
    %v405 = vshrl.u32 %v404, 7
    %v406 = vsub.s32 0, %v405
    %v407 = vrot.slane %v389, %v406
    %v408 = vlaneseq
    %v409 = vshrl.u32 %v408, 7
    %v410 = vsub.s32 1, %v409
    %v411 = vrot.slane %v389, %v410
    %v412 = vlaneseq
    %v413 = vshrl.u32 %v412, 7
    %v414 = vsub.s32 2, %v413
    %v415 = vrot.slane %v389, %v414
    %v416 = vlaneseq
    %v417 = vshrl.u32 %v416, 7
    %v418 = vsub.s32 3, %v417
    %v419 = vrot.slane %v389, %v418
    %v424 = vmul.f32 %v401, %v407
    %v425 = vmul.f32 %v400, %v411
    %v426 = vmul.f32 %v399, %v415
    %v427 = vmul.f32 %v402, %v419
    %428 = vst [vmem:[#allocation2 + $0xe0] sm:$0xff] %v424
    %429 = vst [vmem:[#allocation2 + $0xe8] sm:$0xff] %v425
    %430 = vst [vmem:[#allocation2 + $0xf0] sm:$0xff] %v426
    %431 = vst [vmem:[#allocation2 + $0xf8] sm:$0xff] %v427
    %s432 = scalar_lea.vmem [#allocation8], 32
    %v433 = vld [vmem:[%s432] ss:$8 sm:$0xf]
    %434 = vrot.lane.b32.xlu0 %v88, 111
    %v435 = vpop.permute.xlu0 %434
    %436 = vrot.lane.b32.xlu0 %v89, 111
    %v437 = vpop.permute.xlu0 %436
    %438 = vrot.lane.b32.xlu0 %v90, 111
    %v439 = vpop.permute.xlu0 %438
    %440 = vrot.lane.b32.xlu0 %v91, 111
    %v441 = vpop.permute.xlu0 %440
    %vm442 = vcmp.lt.s32.totalorder %v102, 111
    %v443 = vsel %vm442, %v439, %v441
    %v444 = vsel %vm442, %v437, %v439
    %v445 = vsel %vm442, %v435, %v437
    %v446 = vsel %vm442, %v441, %v435
    %v448 = vlaneseq
    %v449 = vshrl.u32 %v448, 7
    %v450 = vsub.s32 0, %v449
    %v451 = vrot.slane %v433, %v450
    %v452 = vlaneseq
    %v453 = vshrl.u32 %v452, 7
    %v454 = vsub.s32 1, %v453
    %v455 = vrot.slane %v433, %v454
    %v456 = vlaneseq
    %v457 = vshrl.u32 %v456, 7
    %v458 = vsub.s32 2, %v457
    %v459 = vrot.slane %v433, %v458
    %v460 = vlaneseq
    %v461 = vshrl.u32 %v460, 7
    %v462 = vsub.s32 3, %v461
    %v463 = vrot.slane %v433, %v462
    %v468 = vmul.f32 %v445, %v451
    %v469 = vmul.f32 %v444, %v455
    %v470 = vmul.f32 %v443, %v459
    %v471 = vmul.f32 %v446, %v463
    %472 = vst [vmem:[#allocation2 + $0x100] sm:$0xff] %v468
    %473 = vst [vmem:[#allocation2 + $0x108] sm:$0xff] %v469
    %474 = vst [vmem:[#allocation2 + $0x110] sm:$0xff] %v470
    %475 = vst [vmem:[#allocation2 + $0x118] sm:$0xff] %v471
    %v476 = vld [vmem:[#allocation3] sm:$0xf]
    %v477 = vld [vmem:[#allocation2] sm:$0xff]
    %v478 = vld [vmem:[#allocation2 + $0x8] sm:$0xff]
    %v479 = vld [vmem:[#allocation2 + $0x10] sm:$0xff]
    %v480 = vld [vmem:[#allocation2 + $0x18] sm:$0xff]
    %v481 = vld [vmem:[#allocation2 + $0x20] sm:$0xff]
    %v482 = vld [vmem:[#allocation2 + $0x28] sm:$0xff]
    %v483 = vld [vmem:[#allocation2 + $0x30] sm:$0xff]
    %v484 = vld [vmem:[#allocation2 + $0x38] sm:$0xff]
    %v485 = vld [vmem:[#allocation2 + $0x40] sm:$0xff]
    %v486 = vld [vmem:[#allocation2 + $0x48] sm:$0xff]
    %v487 = vld [vmem:[#allocation2 + $0x50] sm:$0xff]
    %v488 = vld [vmem:[#allocation2 + $0x58] sm:$0xff]
    %v489 = vld [vmem:[#allocation2 + $0x60] sm:$0xff]
    %v490 = vld [vmem:[#allocation2 + $0x68] sm:$0xff]
    %v491 = vld [vmem:[#allocation2 + $0x70] sm:$0xff]
    %v492 = vld [vmem:[#allocation2 + $0x78] sm:$0xff]
    %v493 = vld [vmem:[#allocation2 + $0x80] sm:$0xff]
    %v494 = vld [vmem:[#allocation2 + $0x88] sm:$0xff]
    %v495 = vld [vmem:[#allocation2 + $0x90] sm:$0xff]
    %v496 = vld [vmem:[#allocation2 + $0x98] sm:$0xff]
    %v497 = vld [vmem:[#allocation2 + $0xa0] sm:$0xff]
    %v498 = vld [vmem:[#allocation2 + $0xa8] sm:$0xff]
    %v499 = vld [vmem:[#allocation2 + $0xb0] sm:$0xff]
    %v500 = vld [vmem:[#allocation2 + $0xb8] sm:$0xff]
    %v501 = vld [vmem:[#allocation2 + $0xc0] sm:$0xff]
    %v502 = vld [vmem:[#allocation2 + $0xc8] sm:$0xff]
    %v503 = vld [vmem:[#allocation2 + $0xd0] sm:$0xff]
    %v504 = vld [vmem:[#allocation2 + $0xd8] sm:$0xff]
    %v505 = vld [vmem:[#allocation2 + $0xe0] sm:$0xff]
    %v506 = vld [vmem:[#allocation2 + $0xe8] sm:$0xff]
    %v507 = vld [vmem:[#allocation2 + $0xf0] sm:$0xff]
    %v508 = vld [vmem:[#allocation2 + $0xf8] sm:$0xff]
    %v509 = vld [vmem:[#allocation2 + $0x100] sm:$0xff]
    %v510 = vld [vmem:[#allocation2 + $0x108] sm:$0xff]
    %v511 = vld [vmem:[#allocation2 + $0x110] sm:$0xff]
    %v512 = vld [vmem:[#allocation2 + $0x118] sm:$0xff]
    %v513 = vpack.c.bf16 %v481, %v477
    %v514 = vpack.c.bf16 %v482, %v478
    %v515 = vpack.c.bf16 %v483, %v479
    %v516 = vpack.c.bf16 %v484, %v480
    %v517 = vpack.c.bf16 %v489, %v485
    %v518 = vpack.c.bf16 %v490, %v486
    %v519 = vpack.c.bf16 %v491, %v487
    %v520 = vpack.c.bf16 %v492, %v488
    %v521 = vpack.c.bf16 %v497, %v493
    %v522 = vpack.c.bf16 %v498, %v494
    %v523 = vpack.c.bf16 %v499, %v495
    %v524 = vpack.c.bf16 %v500, %v496
    %v525 = vpack.c.bf16 %v505, %v501
    %v526 = vpack.c.bf16 %v506, %v502
    %v527 = vpack.c.bf16 %v507, %v503
    %v528 = vpack.c.bf16 %v508, %v504
    %v529 = vpack.c.bf16 %v509, %v509
    %v530 = vpack.c.bf16 %v510, %v510
    %v531 = vpack.c.bf16 %v511, %v511
    %v532 = vpack.c.bf16 %v512, %v512
    %vm533 = vcmask 588800
    %v535 = vsel %vm533, %v476, 0
    %vm537 = vcmask 1043456
    %v539 = vsel %vm537, %v529, 0
    %v542 = vsel %vm537, %v530, 0
    %v545 = vsel %vm537, %v531, 0
    %v548 = vsel %vm537, %v532, 0
    %550 = vmatprep.subr.bf16.mxu0 0
    %551 = vmatpush1.bf16.msra.mxu0 0
    %552 = vmatprep.subr.bf16.mxu0 0
    %553 = vmatpush1.bf16.msra.mxu0 0
    %554 = vmatprep.subr.bf16.mxu0 0
    %555 = vmatpush1.bf16.msra.mxu0 0
    %556 = vmatprep.subr.bf16.mxu0 %v542
    %557 = vmatpush1.bf16.msra.mxu0 %v539
    %558 = vmatprep.subr.bf16.mxu0 %v526
    %559 = vmatpush1.bf16.msra.mxu0 %v525
    %560 = vmatprep.subr.bf16.mxu0 %v522
    %561 = vmatpush1.bf16.msra.mxu0 %v521
    %562 = vmatprep.subr.bf16.mxu0 %v518
    %563 = vmatpush1.bf16.msra.mxu0 %v517
    %564 = vmatprep.subr.bf16.mxu0 %v514
    %565 = vmatpush1.bf16.msra.mxu0 %v513
    %566 = vmatprep.subr.bf16.mxu0 0
    %567 = vmatpush2.bf16.msra.mxu0 0
    %568 = vmatprep.subr.bf16.mxu0 0
    %569 = vmatpush2.bf16.msra.mxu0 0
    %570 = vmatprep.subr.bf16.mxu0 0
    %571 = vmatpush2.bf16.msra.mxu0 0
    %572 = vmatprep.subr.bf16.mxu0 0
    %573 = vmatpush2.bf16.msra.mxu0 0
    %574 = vmatprep.subr.bf16.mxu0 0
    %575 = vmatpush2.bf16.msra.mxu0 0
    %576 = vmatprep.subr.bf16.mxu0 0
    %577 = vmatpush2.bf16.msra.mxu0 0
    %578 = vmatprep.subr.bf16.mxu0 0
    %579 = vmatpush2.bf16.msra.mxu0 0
    %580 = vmatprep.subr.bf16.mxu0 0
    %581 = vmatpush2.bf16.msra.mxu0 0
    %582 = vmatprep.mubr.bf16.mxu0 0
    %583 = vmatmul.mubr.bf16.gmra.mxu0 %v535
    %v584 = vpop.f32.mrf.mxu0
    %v585 = vadd.f32 0.0, %v584
    %v586 = vpop.f32.mrf.mxu0
    %v587 = vadd.f32 0.0, %v586
    %v588 = vpop.f32.mrf.mxu0
    %v589 = vpop.f32.mrf.mxu0
    %590 = vdwg.mxu0
    %591 = vmatprep.subr.bf16.mxu0 0
    %592 = vmatpush1.bf16.msra.mxu0 0
    %593 = vmatprep.subr.bf16.mxu0 0
    %594 = vmatpush1.bf16.msra.mxu0 0
    %595 = vmatprep.subr.bf16.mxu0 0
    %596 = vmatpush1.bf16.msra.mxu0 0
    %597 = vmatprep.subr.bf16.mxu0 %v548
    %598 = vmatpush1.bf16.msra.mxu0 %v545
    %599 = vmatprep.subr.bf16.mxu0 %v528
    %600 = vmatpush1.bf16.msra.mxu0 %v527
    %601 = vmatprep.subr.bf16.mxu0 %v524
    %602 = vmatpush1.bf16.msra.mxu0 %v523
    %603 = vmatprep.subr.bf16.mxu0 %v520
    %604 = vmatpush1.bf16.msra.mxu0 %v519
    %605 = vmatprep.subr.bf16.mxu0 %v516
    %606 = vmatpush1.bf16.msra.mxu0 %v515
    %607 = vmatprep.subr.bf16.mxu0 0
    %608 = vmatpush2.bf16.msra.mxu0 0
    %609 = vmatprep.subr.bf16.mxu0 0
    %610 = vmatpush2.bf16.msra.mxu0 0
    %611 = vmatprep.subr.bf16.mxu0 0
    %612 = vmatpush2.bf16.msra.mxu0 0
    %613 = vmatprep.subr.bf16.mxu0 0
    %614 = vmatpush2.bf16.msra.mxu0 0
    %615 = vmatprep.subr.bf16.mxu0 0
    %616 = vmatpush2.bf16.msra.mxu0 0
    %617 = vmatprep.subr.bf16.mxu0 0
    %618 = vmatpush2.bf16.msra.mxu0 0
    %619 = vmatprep.subr.bf16.mxu0 0
    %620 = vmatpush2.bf16.msra.mxu0 0
    %621 = vmatprep.subr.bf16.mxu0 0
    %622 = vmatpush2.bf16.msra.mxu0 0
    %623 = vmatprep.mubr.bf16.mxu0 0
    %624 = vmatmul.mubr.bf16.gmra.mxu0 %v535
    %v625 = vpop.f32.mrf.mxu0
    %v626 = vadd.f32 0.0, %v625
    %v627 = vpop.f32.mrf.mxu0
    %v628 = vadd.f32 0.0, %v627
    %v629 = vpop.f32.mrf.mxu0
    %v630 = vpop.f32.mrf.mxu0
    %631 = vdwg.mxu0
    %v632 = vadd.f32 %v585, %v587
    %v633 = vadd.f32 %v632, %v626
    %v634 = vadd.f32 %v633, %v628
    %635 = vadd.xlane.f32.xlu0 %v634
    %v636 = vpop.xlane.xlu0 %635
    %v637 = vrcp.pop 512.0
    %v638 = vmul.f32 %v636, %v637
    %v639 = vmul.f32 %v585, %v585
    %v640 = vmul.f32 %v587, %v587
    %v641 = vmul.f32 %v626, %v626
    %v642 = vmul.f32 %v628, %v628
    %v643 = vadd.f32 %v639, %v640
    %v644 = vadd.f32 %v643, %v641
    %v645 = vadd.f32 %v644, %v642
    %646 = vadd.xlane.f32.xlu0 %v645
    %v647 = vpop.xlane.xlu0 %646
    %v648 = vmul.f32 %v647, %v637
    %v649 = vmul.f32 %v638, %v638
    %v650 = vsub.f32 %v648, %v649
    %v651 = vld [vmem:[%s2] sm:$0xff]
    %v652 = vadd.f32 %v650, 1e-05
    %v653 = vrsqrt.pop %v652
    %v654 = vmul.f32 %v651, %v653
    %v655 = vld [vmem:[%s3] sm:$0xff]
    %v656 = vmul.f32 %v638, %v654
    %v657 = vsub.f32 %v655, %v656
    %659 = vset.pattern.permute.xlu0 0
    %660 = vperm.xlu0 %659, %v654
    %v661 = vpop.permute.xlu0 %660
    %v663 = vmul.f32 %v585, %v661
    %v664 = vmul.f32 %v587, %v661
    %v665 = vmul.f32 %v626, %v661
    %v666 = vmul.f32 %v628, %v661
    %668 = vset.pattern.permute.xlu0 0
    %669 = vperm.xlu0 %668, %v657
    %v670 = vpop.permute.xlu0 %669
    %v672 = vadd.f32 %v663, %v670
    %v673 = vadd.f32 %v664, %v670
    %v674 = vadd.f32 %v665, %v670
    %v675 = vadd.f32 %v666, %v670
    %vm676 = vcmp.gt.f32.partialorder %v672, 0.0
    %vm677 = vcmp.gt.f32.partialorder %v673, 0.0
    %vm678 = vcmp.gt.f32.partialorder %v674, 0.0
    %vm679 = vcmp.gt.f32.partialorder %v675, 0.0
    %v680 = vmul.f32 %v672, 0.01
    %v681 = vmul.f32 %v673, 0.01
    %v682 = vmul.f32 %v674, 0.01
    %v683 = vmul.f32 %v675, 0.01
    %v684 = vsel %vm676, %v672, %v680
    %v685 = vsel %vm677, %v673, %v681
    %v686 = vsel %vm678, %v674, %v682
    %v687 = vsel %vm679, %v675, %v683
    %v688 = vpack.c.bf16 %v684, %v684
    %v689 = vpack.c.bf16 %v685, %v685
    %v690 = vpack.c.bf16 %v686, %v686
    %v691 = vpack.c.bf16 %v687, %v687
    %v692 = vld [vmem:[#allocation9] sm:$0xf]
    %v693 = vld [vmem:[#allocation9 + $0x4] sm:$0xf]
    %v694 = vld [vmem:[#allocation9 + $0x8] sm:$0xf]
    %v695 = vld [vmem:[#allocation9 + $0xc] sm:$0xf]
    %v696 = vld [vmem:[#allocation9 + $0x10] sm:$0xf]
    %v697 = vld [vmem:[#allocation9 + $0x14] sm:$0xf]
    %v698 = vld [vmem:[#allocation9 + $0x18] sm:$0xf]
    %v699 = vld [vmem:[#allocation9 + $0x1c] sm:$0xf]
    %v700 = vld [vmem:[#allocation9 + $0x20] sm:$0xf]
    %v701 = vld [vmem:[#allocation9 + $0x24] sm:$0xf]
    %v702 = vld [vmem:[#allocation9 + $0x28] sm:$0xf]
    %v703 = vld [vmem:[#allocation9 + $0x2c] sm:$0xf]
    %v704 = vld [vmem:[#allocation9 + $0x30] sm:$0xf]
    %v705 = vld [vmem:[#allocation9 + $0x34] sm:$0xf]
    %v706 = vld [vmem:[#allocation9 + $0x38] sm:$0xf]
    %v707 = vld [vmem:[#allocation9 + $0x3c] sm:$0xf]
    %v708 = vld [vmem:[#allocation9 + $0x40] sm:$0xf]
    %v709 = vld [vmem:[#allocation9 + $0x44] sm:$0xf]
    %v710 = vld [vmem:[#allocation9 + $0x48] sm:$0xf]
    %v711 = vld [vmem:[#allocation9 + $0x4c] sm:$0xf]
    %v712 = vld [vmem:[#allocation9 + $0x50] sm:$0xf]
    %v713 = vld [vmem:[#allocation9 + $0x54] sm:$0xf]
    %v714 = vld [vmem:[#allocation9 + $0x58] sm:$0xf]
    %v715 = vld [vmem:[#allocation9 + $0x5c] sm:$0xf]
    %v716 = vld [vmem:[#allocation9 + $0x60] sm:$0xf]
    %v717 = vld [vmem:[#allocation9 + $0x64] sm:$0xf]
    %v718 = vld [vmem:[#allocation9 + $0x68] sm:$0xf]
    %v719 = vld [vmem:[#allocation9 + $0x6c] sm:$0xf]
    %v720 = vld [vmem:[#allocation9 + $0x70] sm:$0xf]
    %v721 = vld [vmem:[#allocation9 + $0x74] sm:$0xf]
    %v722 = vld [vmem:[#allocation9 + $0x78] sm:$0xf]
    %v723 = vld [vmem:[#allocation9 + $0x7c] sm:$0xf]
    %v724 = vld [vmem:[#allocation9 + $0x80] sm:$0xf]
    %v725 = vld [vmem:[#allocation9 + $0x84] sm:$0xf]
    %v726 = vld [vmem:[#allocation9 + $0x88] sm:$0xf]
    %v727 = vld [vmem:[#allocation9 + $0x8c] sm:$0xf]
    %v728 = vld [vmem:[#allocation9 + $0x90] sm:$0xf]
    %v729 = vld [vmem:[#allocation9 + $0x94] sm:$0xf]
    %v730 = vld [vmem:[#allocation9 + $0x98] sm:$0xf]
    %v731 = vld [vmem:[#allocation9 + $0x9c] sm:$0xf]
    %v732 = vld [vmem:[#allocation9 + $0xa0] sm:$0xf]
    %v733 = vld [vmem:[#allocation9 + $0xa4] sm:$0xf]
    %v734 = vld [vmem:[#allocation9 + $0xa8] sm:$0xf]
    %v735 = vld [vmem:[#allocation9 + $0xac] sm:$0xf]
    %v736 = vld [vmem:[#allocation9 + $0xb0] sm:$0xf]
    %v737 = vld [vmem:[#allocation9 + $0xb4] sm:$0xf]
    %v738 = vld [vmem:[#allocation9 + $0xb8] sm:$0xf]
    %v739 = vld [vmem:[#allocation9 + $0xbc] sm:$0xf]
    %v740 = vld [vmem:[#allocation9 + $0xc0] sm:$0xf]
    %v741 = vld [vmem:[#allocation9 + $0xc4] sm:$0xf]
    %v742 = vld [vmem:[#allocation9 + $0xc8] sm:$0xf]
    %v743 = vld [vmem:[#allocation9 + $0xcc] sm:$0xf]
    %v744 = vld [vmem:[#allocation9 + $0xd0] sm:$0xf]
    %v745 = vld [vmem:[#allocation9 + $0xd4] sm:$0xf]
    %v746 = vld [vmem:[#allocation9 + $0xd8] sm:$0xf]
    %v747 = vld [vmem:[#allocation9 + $0xdc] sm:$0xf]
    %v748 = vld [vmem:[#allocation9 + $0xe0] sm:$0xf]
    %v749 = vld [vmem:[#allocation9 + $0xe4] sm:$0xf]
    %v750 = vld [vmem:[#allocation9 + $0xe8] sm:$0xf]
    %v751 = vld [vmem:[#allocation9 + $0xec] sm:$0xf]
    %v752 = vld [vmem:[#allocation9 + $0xf0] sm:$0xf]
    %v753 = vld [vmem:[#allocation9 + $0xf4] sm:$0xf]
    %v754 = vld [vmem:[#allocation9 + $0xf8] sm:$0xf]
    %v755 = vld [vmem:[#allocation9 + $0xfc] sm:$0xf]
    %v820 = vunpack.c.l.b16 %v692
    %v821 = vunpack.c.l.b16 %v693
    %v822 = vunpack.c.l.b16 %v694
    %v823 = vunpack.c.l.b16 %v695
    %v824 = vunpack.c.l.b16 %v696
    %v825 = vunpack.c.l.b16 %v697
    %v826 = vunpack.c.l.b16 %v698
    %v827 = vunpack.c.l.b16 %v699
    %v828 = vunpack.c.l.b16 %v700
    %v829 = vunpack.c.l.b16 %v701
    %v830 = vunpack.c.l.b16 %v702
    %v831 = vunpack.c.l.b16 %v703
    %v832 = vunpack.c.l.b16 %v704
    %v833 = vunpack.c.l.b16 %v705
    %v834 = vunpack.c.l.b16 %v706
    %v835 = vunpack.c.l.b16 %v707
    %v836 = vunpack.c.l.b16 %v708
    %v837 = vunpack.c.l.b16 %v709
    %v838 = vunpack.c.l.b16 %v710
    %v839 = vunpack.c.l.b16 %v711
    %v840 = vunpack.c.l.b16 %v712
    %v841 = vunpack.c.l.b16 %v713
    %v842 = vunpack.c.l.b16 %v714
    %v843 = vunpack.c.l.b16 %v715
    %v844 = vunpack.c.l.b16 %v716
    %v845 = vunpack.c.l.b16 %v717
    %v846 = vunpack.c.l.b16 %v718
    %v847 = vunpack.c.l.b16 %v719
    %v848 = vunpack.c.l.b16 %v720
    %v849 = vunpack.c.l.b16 %v721
    %v850 = vunpack.c.l.b16 %v722
    %v851 = vunpack.c.l.b16 %v723
    %v852 = vunpack.c.l.b16 %v724
    %v853 = vunpack.c.l.b16 %v725
    %v854 = vunpack.c.l.b16 %v726
    %v855 = vunpack.c.l.b16 %v727
    %v856 = vunpack.c.l.b16 %v728
    %v857 = vunpack.c.l.b16 %v729
    %v858 = vunpack.c.l.b16 %v730
    %v859 = vunpack.c.l.b16 %v731
    %v860 = vunpack.c.l.b16 %v732
    %v861 = vunpack.c.l.b16 %v733
    %v862 = vunpack.c.l.b16 %v734
    %v863 = vunpack.c.l.b16 %v735
    %v864 = vunpack.c.l.b16 %v736
    %v865 = vunpack.c.l.b16 %v737
    %v866 = vunpack.c.l.b16 %v738
    %v867 = vunpack.c.l.b16 %v739
    %v868 = vunpack.c.l.b16 %v740
    %v869 = vunpack.c.l.b16 %v741
    %v870 = vunpack.c.l.b16 %v742
    %v871 = vunpack.c.l.b16 %v743
    %v872 = vunpack.c.l.b16 %v744
    %v873 = vunpack.c.l.b16 %v745
    %v874 = vunpack.c.l.b16 %v746
    %v875 = vunpack.c.l.b16 %v747
    %v876 = vunpack.c.l.b16 %v748
    %v877 = vunpack.c.l.b16 %v749
    %v878 = vunpack.c.l.b16 %v750
    %v879 = vunpack.c.l.b16 %v751
    %v880 = vunpack.c.l.b16 %v752
    %v881 = vunpack.c.l.b16 %v753
    %v882 = vunpack.c.l.b16 %v754
    %v883 = vunpack.c.l.b16 %v755
    %v884 = vpack.c.b16 %v821, %v820
    %v885 = vpack.c.b16 %v823, %v822
    %v886 = vpack.c.b16 %v825, %v824
    %v887 = vpack.c.b16 %v827, %v826
    %v888 = vpack.c.b16 %v829, %v828
    %v889 = vpack.c.b16 %v831, %v830
    %v890 = vpack.c.b16 %v833, %v832
    %v891 = vpack.c.b16 %v835, %v834
    %v892 = vpack.c.b16 %v837, %v836
    %v893 = vpack.c.b16 %v839, %v838
    %v894 = vpack.c.b16 %v841, %v840
    %v895 = vpack.c.b16 %v843, %v842
    %v896 = vpack.c.b16 %v845, %v844
    %v897 = vpack.c.b16 %v847, %v846
    %v898 = vpack.c.b16 %v849, %v848
    %v899 = vpack.c.b16 %v851, %v850
    %v900 = vpack.c.b16 %v853, %v852
    %v901 = vpack.c.b16 %v855, %v854
    %v902 = vpack.c.b16 %v857, %v856
    %v903 = vpack.c.b16 %v859, %v858
    %v904 = vpack.c.b16 %v861, %v860
    %v905 = vpack.c.b16 %v863, %v862
    %v906 = vpack.c.b16 %v865, %v864
    %v907 = vpack.c.b16 %v867, %v866
    %v908 = vpack.c.b16 %v869, %v868
    %v909 = vpack.c.b16 %v871, %v870
    %v910 = vpack.c.b16 %v873, %v872
    %v911 = vpack.c.b16 %v875, %v874
    %v912 = vpack.c.b16 %v877, %v876
    %v913 = vpack.c.b16 %v879, %v878
    %v914 = vpack.c.b16 %v881, %v880
    %v915 = vpack.c.b16 %v883, %v882
    %948 = vmatprep.subr.bf16.mxu0 0
    %949 = vmatpush1.bf16.msra.mxu0 %v891
    %950 = vmatprep.subr.bf16.mxu0 0
    %951 = vmatpush1.bf16.msra.mxu0 %v890
    %952 = vmatprep.subr.bf16.mxu0 0
    %953 = vmatpush1.bf16.msra.mxu0 %v889
    %954 = vmatprep.subr.bf16.mxu0 0
    %955 = vmatpush1.bf16.msra.mxu0 %v888
    %956 = vmatprep.subr.bf16.mxu0 0
    %957 = vmatpush1.bf16.msra.mxu0 %v887
    %958 = vmatprep.subr.bf16.mxu0 0
    %959 = vmatpush1.bf16.msra.mxu0 %v886
    %960 = vmatprep.subr.bf16.mxu0 0
    %961 = vmatpush1.bf16.msra.mxu0 %v885
    %962 = vmatprep.subr.bf16.mxu0 0
    %963 = vmatpush1.bf16.msra.mxu0 %v884
    %964 = vmatprep.subr.bf16.mxu0 0
    %965 = vmatpush2.bf16.msra.mxu0 %v899
    %966 = vmatprep.subr.bf16.mxu0 0
    %967 = vmatpush2.bf16.msra.mxu0 %v898
    %968 = vmatprep.subr.bf16.mxu0 0
    %969 = vmatpush2.bf16.msra.mxu0 %v897
    %970 = vmatprep.subr.bf16.mxu0 0
    %971 = vmatpush2.bf16.msra.mxu0 %v896
    %972 = vmatprep.subr.bf16.mxu0 0
    %973 = vmatpush2.bf16.msra.mxu0 %v895
    %974 = vmatprep.subr.bf16.mxu0 0
    %975 = vmatpush2.bf16.msra.mxu0 %v894
    %976 = vmatprep.subr.bf16.mxu0 0
    %977 = vmatpush2.bf16.msra.mxu0 %v893
    %978 = vmatprep.subr.bf16.mxu0 0
    %979 = vmatpush2.bf16.msra.mxu0 %v892
    %980 = vmatprep.mubr.bf16.mxu0 %v689
    %981 = vmatmul.mubr.bf16.gmra.mxu0 %v688
    %v982 = vpop.f32.mrf.mxu0
    %v983 = vadd.f32 0.0, %v982
    %v984 = vpop.f32.mrf.mxu0
    %v985 = vpop.f32.mrf.mxu0
    %v986 = vpop.f32.mrf.mxu0
    %987 = vdwg.mxu0
    %988 = vmatprep.subr.bf16.mxu0 0
    %989 = vmatpush1.bf16.msra.mxu0 %v907
    %990 = vmatprep.subr.bf16.mxu0 0
    %991 = vmatpush1.bf16.msra.mxu0 %v906
    %992 = vmatprep.subr.bf16.mxu0 0
    %993 = vmatpush1.bf16.msra.mxu0 %v905
    %994 = vmatprep.subr.bf16.mxu0 0
    %995 = vmatpush1.bf16.msra.mxu0 %v904
    %996 = vmatprep.subr.bf16.mxu0 0
    %997 = vmatpush1.bf16.msra.mxu0 %v903
    %998 = vmatprep.subr.bf16.mxu0 0
    %999 = vmatpush1.bf16.msra.mxu0 %v902
    %1000 = vmatprep.subr.bf16.mxu0 0
    %1001 = vmatpush1.bf16.msra.mxu0 %v901
    %1002 = vmatprep.subr.bf16.mxu0 0
    %1003 = vmatpush1.bf16.msra.mxu0 %v900
    %1004 = vmatprep.subr.bf16.mxu0 0
    %1005 = vmatpush2.bf16.msra.mxu0 %v915
    %1006 = vmatprep.subr.bf16.mxu0 0
    %1007 = vmatpush2.bf16.msra.mxu0 %v914
    %1008 = vmatprep.subr.bf16.mxu0 0
    %1009 = vmatpush2.bf16.msra.mxu0 %v913
    %1010 = vmatprep.subr.bf16.mxu0 0
    %1011 = vmatpush2.bf16.msra.mxu0 %v912
    %1012 = vmatprep.subr.bf16.mxu0 0
    %1013 = vmatpush2.bf16.msra.mxu0 %v911
    %1014 = vmatprep.subr.bf16.mxu0 0
    %1015 = vmatpush2.bf16.msra.mxu0 %v910
    %1016 = vmatprep.subr.bf16.mxu0 0
    %1017 = vmatpush2.bf16.msra.mxu0 %v909
    %1018 = vmatprep.subr.bf16.mxu0 0
    %1019 = vmatpush2.bf16.msra.mxu0 %v908
    %1020 = vmatprep.mubr.bf16.mxu0 %v691
    %1021 = vmatmul.mubr.bf16.gmra.mxu0 %v690
    %v1022 = vpop.f32.mrf.mxu0
    %v1023 = vadd.f32 %v983, %v1022
    %v1024 = vpop.f32.mrf.mxu0
    %v1025 = vpop.f32.mrf.mxu0
    %v1026 = vpop.f32.mrf.mxu0
    %1027 = vdwg.mxu0
    %v1028 = vld [vmem:[%s8] sm:$0x1]
    %1029 = vrot.lane.b32.xlu0 %v1023, 9
    %v1030 = vpop.permute.xlu0 %1029
    %v1031 = vlaneseq
    %v1032 = vshrl.u32 %v1031, 7
    %v1033 = vsub.s32 0, %v1032
    %v1034 = vrot.slane %v1028, %v1033
    %v1035 = vmul.f32 %v1030, %v1034
    %v1036 = vld [vmem:[%s8 + $0x1] sm:$0x1]
    %1037 = vrot.lane.b32.xlu0 %v1023, 8
    %v1038 = vpop.permute.xlu0 %1037
    %v1039 = vlaneseq
    %v1040 = vshrl.u32 %v1039, 7
    %v1041 = vsub.s32 0, %v1040
    %v1042 = vrot.slane %v1036, %v1041
    %v1043 = vmul.f32 %v1038, %v1042
    %v1044 = vld [vmem:[%s8 + $0x2] sm:$0x1]
    %1045 = vrot.lane.b32.xlu0 %v1023, 7
    %v1046 = vpop.permute.xlu0 %1045
    %v1047 = vlaneseq
    %v1048 = vshrl.u32 %v1047, 7
    %v1049 = vsub.s32 0, %v1048
    %v1050 = vrot.slane %v1044, %v1049
    %v1051 = vmul.f32 %v1046, %v1050
    %v1052 = vld [vmem:[%s8 + $0x3] sm:$0x1]
    %1053 = vrot.lane.b32.xlu0 %v1023, 1
    %v1054 = vpop.permute.xlu0 %1053
    %v1055 = vlaneseq
    %v1056 = vshrl.u32 %v1055, 7
    %v1057 = vsub.s32 0, %v1056
    %v1058 = vrot.slane %v1052, %v1057
    %v1059 = vmul.f32 %v1054, %v1058
    %v1060 = vld [vmem:[%s8 + $0x4] sm:$0x1]
    %v1061 = vlaneseq
    %v1062 = vshrl.u32 %v1061, 7
    %v1063 = vsub.s32 0, %v1062
    %v1064 = vrot.slane %v1060, %v1063
    %v1065 = vmul.f32 %v1023, %v1064
    %v1066 = vld [vmem:[%s8 + $0x5] sm:$0x1]
    %1067 = vrot.lane.b32.xlu0 %v1023, 127
    %v1068 = vpop.permute.xlu0 %1067
    %v1069 = vlaneseq
    %v1070 = vshrl.u32 %v1069, 7
    %v1071 = vsub.s32 0, %v1070
    %v1072 = vrot.slane %v1066, %v1071
    %v1073 = vmul.f32 %v1068, %v1072
    %v1074 = vld [vmem:[%s8 + $0x6] sm:$0x1]
    %1075 = vrot.lane.b32.xlu0 %v1023, 121
    %v1076 = vpop.permute.xlu0 %1075
    %v1077 = vlaneseq
    %v1078 = vshrl.u32 %v1077, 7
    %v1079 = vsub.s32 0, %v1078
    %v1080 = vrot.slane %v1074, %v1079
    %v1081 = vmul.f32 %v1076, %v1080
    %v1082 = vld [vmem:[%s8 + $0x7] sm:$0x1]
    %1083 = vrot.lane.b32.xlu0 %v1023, 120
    %v1084 = vpop.permute.xlu0 %1083
    %v1085 = vlaneseq
    %v1086 = vshrl.u32 %v1085, 7
    %v1087 = vsub.s32 0, %v1086
    %v1088 = vrot.slane %v1082, %v1087
    %v1089 = vmul.f32 %v1084, %v1088
    %v1090 = vld [vmem:[%s8 + $0x8] sm:$0x1]
    %1091 = vrot.lane.b32.xlu0 %v1023, 119
    %v1092 = vpop.permute.xlu0 %1091
    %v1093 = vlaneseq
    %v1094 = vshrl.u32 %v1093, 7
    %v1095 = vsub.s32 0, %v1094
    %v1096 = vrot.slane %v1090, %v1095
    %v1097 = vmul.f32 %v1092, %v1096
    %v1098 = vld [vmem:[#allocation6] sm:$0xf]
    %v1099 = vpack.c.bf16 %v1043, %v1035
    %v1100 = vpack.c.bf16 %v1059, %v1051
    %v1101 = vpack.c.bf16 %v1073, %v1065
    %v1102 = vpack.c.bf16 %v1089, %v1081
    %v1103 = vpack.c.bf16 %v1097, %v1097
    %v1105 = vsel %vm533, %v1098, 0
    %v1108 = vsel %vm537, %v1103, 0
    %1110 = vmatprep.subr.bf16.mxu0 0
    %1111 = vmatpush1.bf16.msra.mxu0 0
    %1112 = vmatprep.subr.bf16.mxu0 0
    %1113 = vmatpush1.bf16.msra.mxu0 0
    %1114 = vmatprep.subr.bf16.mxu0 0
    %1115 = vmatpush1.bf16.msra.mxu0 0
    %1116 = vmatprep.subr.bf16.mxu0 0
    %1117 = vmatpush1.bf16.msra.mxu0 %v1108
    %1118 = vmatprep.subr.bf16.mxu0 0
    %1119 = vmatpush1.bf16.msra.mxu0 %v1102
    %1120 = vmatprep.subr.bf16.mxu0 0
    %1121 = vmatpush1.bf16.msra.mxu0 %v1101
    %1122 = vmatprep.subr.bf16.mxu0 0
    %1123 = vmatpush1.bf16.msra.mxu0 %v1100
    %1124 = vmatprep.subr.bf16.mxu0 0
    %1125 = vmatpush1.bf16.msra.mxu0 %v1099
    %1126 = vmatprep.subr.bf16.mxu0 0
    %1127 = vmatpush2.bf16.msra.mxu0 0
    %1128 = vmatprep.subr.bf16.mxu0 0
    %1129 = vmatpush2.bf16.msra.mxu0 0
    %1130 = vmatprep.subr.bf16.mxu0 0
    %1131 = vmatpush2.bf16.msra.mxu0 0
    %1132 = vmatprep.subr.bf16.mxu0 0
    %1133 = vmatpush2.bf16.msra.mxu0 0
    %1134 = vmatprep.subr.bf16.mxu0 0
    %1135 = vmatpush2.bf16.msra.mxu0 0
    %1136 = vmatprep.subr.bf16.mxu0 0
    %1137 = vmatpush2.bf16.msra.mxu0 0
    %1138 = vmatprep.subr.bf16.mxu0 0
    %1139 = vmatpush2.bf16.msra.mxu0 0
    %1140 = vmatprep.subr.bf16.mxu0 0
    %1141 = vmatpush2.bf16.msra.mxu0 0
    %1142 = vmatprep.mubr.bf16.mxu0 0
    %1143 = vmatmul.mubr.bf16.gmra.mxu0 %v1105
    %v1144 = vpop.f32.mrf.mxu0
    %v1145 = vadd.f32 0.0, %v1144
    %v1146 = vpop.f32.mrf.mxu0
    %v1147 = vpop.f32.mrf.mxu0
    %v1148 = vpop.f32.mrf.mxu0
    %1149 = vdwg.mxu0
    %1150 = vadd.xlane.f32.xlu0 %v1145
    %v1151 = vpop.xlane.xlu0 %1150
    %v1152 = vrcp.pop 128.0
    %v1153 = vmul.f32 %v1151, %v1152
    %v1154 = vmul.f32 %v1145, %v1145
    %1155 = vadd.xlane.f32.xlu0 %v1154
    %v1156 = vpop.xlane.xlu0 %1155
    %v1157 = vmul.f32 %v1156, %v1152
    %v1158 = vmul.f32 %v1153, %v1153
    %v1159 = vsub.f32 %v1157, %v1158
    %v1160 = vld [vmem:[%s5] sm:$0xff]
    %v1161 = vadd.f32 %v1159, 1e-05
    %v1162 = vrsqrt.pop %v1161
    %v1163 = vmul.f32 %v1160, %v1162
    %v1164 = vld [vmem:[%s6] sm:$0xff]
    %v1165 = vmul.f32 %v1153, %v1163
    %v1166 = vsub.f32 %v1164, %v1165
    %1168 = vset.pattern.permute.xlu0 0
    %1169 = vperm.xlu0 %1168, %v1163
    %v1170 = vpop.permute.xlu0 %1169
    %v1172 = vmul.f32 %v1145, %v1170
    %1174 = vset.pattern.permute.xlu0 0
    %1175 = vperm.xlu0 %1174, %v1166
    %v1176 = vpop.permute.xlu0 %1175
    %v1178 = vadd.f32 %v1172, %v1176
    %vm1179 = vcmp.gt.f32.partialorder %v1178, 0.0
    %v1180 = vmul.f32 %v1178, 0.01
    %v1181 = vsel %vm1179, %v1178, %v1180
    %1182 = vst [vmem:[#allocation11] sm:$0xff] %v1181
    // Predicated region
    $region58: #{tpu_custom_call.1} parent=1 // pred_check
      _
    $region59: #{tpu_custom_call.1} parent=1 // pred_check_branch
      %1184 = sbr.rel (0) target = $region61
    $region60: #{tpu_custom_call.1} parent=1 // pred_region
      %s1186 = ssub.s32 128, 128
      %1187 = vsyncadd [#allocation5], %s1186
      %s1189 = sshll.u32 [#allocation11], 4
      %s1190 = int_to_ptr.vmem [resolvable:$true] %s1189
      %1192 = dma.vmem_to_hbm [thread:$0]  %s1190, 128, %s10, [#allocation5]
    $region61: #{tpu_custom_call.1} parent=1 // pred_fallthru
      _
    // Predicated region
    $region62: #{tpu_custom_call.1} parent=1 // pred_check
      _
    $region63: #{tpu_custom_call.1} parent=1 // pred_check_branch
      %1194 = sbr.rel (0) target = $region65
    $region64: #{tpu_custom_call.1} parent=1 // pred_region
      %1195 = dma.done [#allocation5], 128
    $region65: #{tpu_custom_call.1} parent=1 // pred_fallthru
      _
    %1196 = vsyncpa [#allocation4], 1
    %1197 = vsyncpa [#allocation7], 1
    %1198 = vsyncpa [#allocation10], 1
    %1199 = vsyncpa [#allocation5], 1

</llo_original>
